<compile_context>
chip_gen: v7x
topology: tpu7x:2x2x1
jax: 0.10.0
libtpu: 0.0.40
codegen_flags: <defaults>
</compile_context>

<pallas_src>
import jax
import jax.numpy as jnp
from jax.experimental import pallas as pl
from jax.experimental.pallas import tpu as pltpu


# ----------------------------------------------------------------------------
# In-kernel helpers (all values live in the lane-merged (rows, W*C) layout)
# ----------------------------------------------------------------------------
def _pointwise(x_bf16, w_ref, b_ref):
    """1x1 conv (+ folded BN bias) + ReLU.

    x_bf16: (R, W*Cin) bf16.  w_ref: block-diagonal (W*Cin, W*Cout) bf16 weight
    (kron(I_W, w)), so the matmul stays in the lane-merged layout and its output
    is already lane-dense.  Single-pass bf16 MXU matmul, f32 accumulation.
    """
    y = jnp.dot(x_bf16, w_ref[...], preferred_element_type=jnp.float32)
    return jnp.maximum(y + b_ref[...], 0.0)


def _depthwise3x3(h, wd_ref, bd_ref, img_h, ch):
    """Depthwise 3x3, stride 1, SAME padding (+ folded BN bias, no activation).

    h: (R, W*ch) f32 with R = Nb*img_h (H on sublanes, W and C merged on lanes).
    wd_ref: (9, W*ch) taps, row-major k = ky*3 + kx, pre-tiled over W.
    bd_ref: (1, W*ch).

    All shifts are pltpu.roll (XLU) + border masks:
      * x +- 1 -> lane roll by +-ch on the merged lane axis,
      * y +- 1 -> +-1 sublane row roll, masked at image boundaries,
    so there are no padded copies, no concatenates and no relayouts, and every
    VPU FMA runs on lane-dense vregs.
    """
    r, wc = h.shape
    wd = wd_ref[...]                                            # (9, W*ch) f32
    lane = jax.lax.broadcasted_iota(jnp.int32, (1, wc), 1)
    yrow = jax.lax.broadcasted_iota(jnp.int32, (r, 1), 0) % img_h

    left = jnp.where(lane >= ch, pltpu.roll(h, shift=ch, axis=1), 0.0)            # in[y, x-1]
    right = jnp.where(lane < wc - ch, pltpu.roll(h, shift=wc - ch, axis=1), 0.0)  # in[y, x+1]

    row_t = wd[0] * left + wd[1] * h + wd[2] * right   # taps ky=0 (source row y-1)
    row_m = wd[3] * left + wd[4] * h + wd[5] * right   # taps ky=1 (source row y)
    row_b = wd[6] * left + wd[7] * h + wd[8] * right   # taps ky=2 (source row y+1)

    from_up = jnp.where(yrow > 0, pltpu.roll(row_t, shift=1, axis=0), 0.0)
    from_dn = jnp.where(yrow < img_h - 1, pltpu.roll(row_b, shift=r - 1, axis=0), 0.0)
    return row_m + bd_ref[...] + from_up + from_dn


# ----------------------------------------------------------------------------
# Kernels (one grid step == one batch tile of images, lane-merged layout)
# ----------------------------------------------------------------------------
def _make_same_kernel(img_w, c, s):
    """stride == 1 and in_channels == out_channels."""

    def kernel(x_ref, w1bd, b1t, wdt, bdt, w2bd, b2t, pidbd, o_ref):
        nb, img_h, _ = x_ref.shape
        xb = x_ref[...].reshape(nb * img_h, img_w * c).astype(jnp.bfloat16)

        # residual: conv1x1 -> dw3x3 -> conv1x1.  x.chunk(2) is folded into
        # w1bd's zero rows; channel_shuffle(groups=2) is folded into w2bd's
        # odd output columns (even lanes stay relu(0) == 0).
        r = _pointwise(xb, w1bd, b1t)                        # (R, W*s) f32
        r = _depthwise3x3(r, wdt, bdt, img_h, s)
        r = _pointwise(r.astype(jnp.bfloat16), w2bd, b2t)    # odd lanes populated

        # identity half -> even lanes.  pidbd is an exact 0/1 block-diagonal
        # matrix in bf16; with bf16 activations the MXU pass-through is exact
        # (single 1.0*x product, f32 accumulate) - no Precision.HIGHEST needed.
        ident = jnp.dot(xb, pidbd[...], preferred_element_type=jnp.float32)

        o_ref[...] = (r + ident).reshape(nb, img_h, img_w * c).astype(o_ref.dtype)

    return kernel


def _make_proj_kernel(img_w, cin, cout, s):
    """stride == 1 and in_channels != out_channels (projection shortcut)."""

    def kernel(x_ref, sdwt, sdbt, swsbd, sbst,
               rw1bd, rb1t, rdwt, rdbt, rw2bd, rb2t, o_ref):
        nb, img_h, _ = x_ref.shape
        x = x_ref[...].reshape(nb * img_h, img_w * cin)
        xb = x.astype(jnp.bfloat16)

        # shortcut: dw3x3 (no act) -> conv1x1(+ReLU), pre-scattered to even lanes.
        sc = _depthwise3x3(x.astype(jnp.float32), sdwt, sdbt, img_h, cin)
        sc = _pointwise(sc.astype(jnp.bfloat16), swsbd, sbst)   # even lanes

        # residual: conv1x1(+ReLU) -> dw3x3 -> conv1x1(+ReLU), to odd lanes.
        r = _pointwise(xb, rw1bd, rb1t)                          # (R, W*s)
        r = _depthwise3x3(r, rdwt, rdbt, img_h, s)
        r = _pointwise(r.astype(jnp.bfloat16), rw2bd, rb2t)      # odd lanes

        o_ref[...] = (sc + r).reshape(nb, img_h, img_w * cout).astype(o_ref.dtype)

    return kernel


# ----------------------------------------------------------------------------
# pallas_call wrapper
# ----------------------------------------------------------------------------
def _const_spec(shape):
    zeros = (0,) * len(shape)
    return pl.BlockSpec(shape, lambda i, _z=zeros: _z)


def _vmem_capacity_bytes():
    try:
        cap = int(pltpu.get_tpu_info().vmem_capacity_bytes)
        if cap > 0:
            return cap
    except Exception:
        pass
    return 64 * 1024 * 1024        # conservative fallback (v7x per-core VMEM)


def _pick_batch_tile(n, per_image_bytes, budget_bytes, min_steps=2):
    """Largest divisor of n that fits the activation budget while keeping at
    least `min_steps` grid steps: >=2 parallel steps feeds both v7x TensorCores
    and lets the BlockSpec pipeline overlap DMA with compute on v5e/v6e."""
    bt = max(1, budget_bytes // max(per_image_bytes, 1))
    if n >= min_steps:
        bt = min(bt, n // min_steps)
    bt = int(max(1, min(bt, n)))
    while n % bt:
        bt -= 1
    return bt


def _run_kernel(kernel, x_merged, params, img_h, img_w, cin, cout, out_dtype):
    n = x_merged.shape[0]
    act_bytes = jnp.dtype(out_dtype).itemsize
    cap = _vmem_capacity_bytes()
    param_bytes = sum(int(p.size) * jnp.dtype(p.dtype).itemsize for p in params)
    # Per-image footprint: double-buffered input+output blocks plus ~12 live f32
    # temporaries (the projection variant runs two depthwise passes, one at cin).
    per_image = img_h * img_w * (2 * (cin + cout) * act_bytes
                                 + 12 * max(cin, cout) * 4)
    act_budget = max(2 * 2**20, min(cap // 4, 32 * 2**20) - 2 * param_bytes)
    bt = _pick_batch_tile(n, per_image, act_budget)
    vmem_limit = int(min(cap * 3 // 4,
                         max(32 * 2**20, 2 * (per_image * bt + param_bytes))))

    # Block last two dims equal the full array dims (H, W*C); W*C is lane-dense.
    in_specs = [pl.BlockSpec((bt, img_h, img_w * cin), lambda i: (i, 0, 0))]
    in_specs += [_const_spec(p.shape) for p in params]
    out_specs = pl.BlockSpec((bt, img_h, img_w * cout), lambda i: (i, 0, 0))

    return pl.pallas_call(
        kernel,
        out_shape=jax.ShapeDtypeStruct((n, img_h, img_w * cout), out_dtype),
        grid_spec=pltpu.PrefetchScalarGridSpec(
            num_scalar_prefetch=0,
            grid=(n // bt,),
            in_specs=in_specs,
            out_specs=out_specs,
        ),
        compiler_params=pltpu.CompilerParams(
            dimension_semantics=("parallel",),      # independent batch blocks
            vmem_limit_bytes=vmem_limit,
        ),
    )(x_merged, *params)


# ----------------------------------------------------------------------------
# Pure-JAX reference helpers (independent, unfused check)
# ----------------------------------------------------------------------------
def _dw_ref(x, wd, bd):
    c = x.shape[-1]
    w = wd.reshape(3, 3, 1, c)
    y = jax.lax.conv_general_dilated(
        x, w, window_strides=(1, 1), padding=((1, 1), (1, 1)),
        dimension_numbers=("NHWC", "HWIO", "NHWC"),
        feature_group_count=c, precision=jax.lax.Precision.HIGHEST)
    return y + bd.reshape(1, 1, 1, c)


def _pw_ref(x, w, b):
    y = jnp.einsum("nhwc,cd->nhwd", x, w, precision=jax.lax.Precision.HIGHEST)
    return jnp.maximum(y + b.reshape(1, 1, 1, -1), 0.0)


def _channel_shuffle_nhwc(x, groups):
    n, h, w, c = x.shape
    return x.reshape(n, h, w, groups, c // groups).swapaxes(3, 4).reshape(n, h, w, c)


# ----------------------------------------------------------------------------
# Module wrapper
# ----------------------------------------------------------------------------
class ShuffleUnitPallas:
    """ShuffleUnit (stride == 1) with split / concat / channel_shuffle fused.

    The fused path (`__call__`) is NHWC in / NHWC out and works best with bf16
    activations end-to-end; keep a network built from these units NHWC + bf16 so
    layout transposes and dtype casts happen once at the network boundary.
    `forward_nchw` is a drop-in NCHW adapter matching the PyTorch interface.
    """

    def __init__(self, in_channels, out_channels, stride, key):
        if stride != 1:
            # TODO(synk): stride=2 (spatially strided depthwise + downsampled
            # shortcut) is not implemented in the Pallas path.
            raise NotImplementedError("only stride == 1 is implemented")
        self.in_channels = in_channels
        self.out_channels = out_channels
        self.stride = stride
        self.split = out_channels // 2
        self._cache = {}
        s, cin = self.split, in_channels

        def init(k, shape, scale=0.1):
            return (scale * jax.random.normal(k, shape)).astype(jnp.float32)

        def q(w):   # pointwise weights as the exact bf16 values the MXU consumes
            return w.astype(jnp.bfloat16).astype(jnp.float32)

        if in_channels == out_channels:
            ks = jax.random.split(key, 6)
            self.w1 = q(init(ks[0], (s, s)));   self.b1 = init(ks[1], (s,))
            self.wd = init(ks[2], (9, s));      self.bd = init(ks[3], (s,))
            self.w2 = q(init(ks[4], (s, s)));   self.b2 = init(ks[5], (s,))
        else:
            ks = jax.random.split(key, 10)
            self.sdw = init(ks[0], (9, cin));       self.sdb = init(ks[1], (cin,))
            self.sw = q(init(ks[2], (cin, s)));     self.sb = init(ks[3], (s,))
            self.rw1 = q(init(ks[4], (cin, s)));    self.rb1 = init(ks[5], (s,))
            self.rdw = init(ks[6], (9, s));         self.rdb = init(ks[7], (s,))
            self.rw2 = q(init(ks[8], (s, s)));      self.rb2 = init(ks[9], (s,))

    # -- parameter packing for a given image width W ---------------------------
    def _packed(self, img_w):
        """Kernel + lane-merged parameters for image width W.

        1x1-conv weights become block-diagonal kron(I_W, w) bf16 matrices so the
        matmuls operate directly on the merged W*C lane axis (no relayouts);
        chunk(2) / channel_shuffle(groups=2) are folded in by scattering the
        shortcut / identity channels to even output lanes and residual channels
        to odd lanes.  Depthwise taps and all biases are tiled over W.
        NOTE: block-diagonal weights scale as (W*C)^2; this fold targets the
        small W*C regime typical of these layers.
        # TODO(synk): for very large W*C, block the W axis (with a halo) instead.
        """
        if img_w in self._cache:
            return self._cache[img_w]
        eye_w = jnp.eye(img_w, dtype=jnp.float32)

        def bdiag(w):
            return jnp.kron(eye_w, w).astype(jnp.bfloat16)

        def tile_row(v):
            return jnp.tile(v.reshape(1, -1), (1, img_w))

        s = self.split
        if self.in_channels == self.out_channels:
            c = self.out_channels
            w1f = jnp.concatenate([jnp.zeros((s, s), jnp.float32), self.w1], 0)  # chunk fold
            w2s = jnp.zeros((s, c), jnp.float32).at[:, 1::2].set(self.w2)        # residual -> odd
            b2s = jnp.zeros((c,), jnp.float32).at[1::2].set(self.b2)
            pid = jnp.zeros((c, c), jnp.float32).at[:s, 0::2].set(
                jnp.eye(s, dtype=jnp.float32))                                   # x1 -> even (0/1)
            params = (bdiag(w1f), tile_row(self.b1),
                      jnp.tile(self.wd, (1, img_w)), tile_row(self.bd),
                      bdiag(w2s), tile_row(b2s),
                      bdiag(pid))
            kernel = _make_same_kernel(img_w, c, s)
        else:
            cin, cout = self.in_channels, self.out_channels
            sws = jnp.zeros((cin, cout), jnp.float32).at[:, 0::2].set(self.sw)    # shortcut -> even
            sbs = jnp.zeros((cout,), jnp.float32).at[0::2].set(self.sb)
            rw2s = jnp.zeros((s, cout), jnp.float32).at[:, 1::2].set(self.rw2)    # residual -> odd
            rb2s = jnp.zeros((cout,), jnp.float32).at[1::2].set(self.rb2)
            params = (jnp.tile(self.sdw, (1, img_w)), tile_row(self.sdb),
                      bdiag(sws), tile_row(sbs),
                      bdiag(self.rw1), tile_row(self.rb1),
                      jnp.tile(self.rdw, (1, img_w)), tile_row(self.rdb),
                      bdiag(rw2s), tile_row(rb2s))
            kernel = _make_proj_kernel(img_w, cin, cout, s)
        self._cache[img_w] = (kernel, params)
        return kernel, params

    # -- fused forward, NHWC ----------------------------------------------------
    def __call__(self, x_nhwc):
        n, img_h, img_w, cin = x_nhwc.shape
        assert cin == self.in_channels
        kernel, params = self._packed(img_w)
        x_merged = x_nhwc.reshape(n, img_h, img_w * cin)   # free metadata reshape on HBM
        out = _run_kernel(kernel, x_merged, params, img_h, img_w,
                          cin, self.out_channels, x_nhwc.dtype)
        return out.reshape(n, img_h, img_w, self.out_channels)

    # -- NCHW adapter (PyTorch-layout parity; transposes are boundary-only glue)
    def forward_nchw(self, x_nchw):
        x = jnp.transpose(x_nchw, (0, 2, 3, 1))
        return jnp.transpose(self(x), (0, 3, 1, 2))

    # -- pure-JAX reference (explicit concat + channel_shuffle, unfused, f32) ---
    def reference_nhwc(self, x):
        x = x.astype(jnp.float32)
        s = self.split
        if self.in_channels == self.out_channels:
            x1, x2 = x[..., :s], x[..., s:]
            r = _pw_ref(x2, self.w1, self.b1)
            r = _dw_ref(r, self.wd, self.bd)
            r = _pw_ref(r, self.w2, self.b2)
            out = jnp.concatenate([x1, r], axis=-1)
        else:
            sc = _pw_ref(_dw_ref(x, self.sdw, self.sdb), self.sw, self.sb)
            r = _pw_ref(x, self.rw1, self.rb1)
            r = _dw_ref(r, self.rdw, self.rdb)
            r = _pw_ref(r, self.rw2, self.rb2)
            out = jnp.concatenate([sc, r], axis=-1)
        return _channel_shuffle_nhwc(out, 2)

    def reference_nchw(self, x_nchw):
        x = jnp.transpose(x_nchw, (0, 2, 3, 1))
        return jnp.transpose(self.reference_nhwc(x), (0, 3, 1, 2))


# ----------------------------------------------------------------------------
# Demo
# ----------------------------------------------------------------------------
if __name__ == "__main__":
    root = jax.random.PRNGKey(0)
    k1, k2, k3, k4 = jax.random.split(root, 4)

    # Activations are bf16 end-to-end (the layer is HBM-bandwidth bound and the
    # MXU consumes bf16 anyway).  The reference consumes the same bf16 input and
    # the same bf16-rounded weights; the tolerance below covers only the bf16
    # activation rounding at the matmul inputs and the bf16 output store.

    # Case 1: in_channels == out_channels (identity half), fused NHWC fast path.
    unit_a = ShuffleUnitPallas(32, 32, 1, k1)
    x_a = jax.random.normal(k2, (2, 16, 16, 32), jnp.float32).astype(jnp.bfloat16)
    y_a = jax.block_until_ready(unit_a(x_a))
    assert y_a.shape == (2, 16, 16, 32) and y_a.dtype == jnp.bfloat16
    ref_a = unit_a.reference_nhwc(x_a)
    assert jnp.allclose(y_a.astype(jnp.float32), ref_a, rtol=2e-2, atol=2e-2), \
        "same-branch mismatch"

    # Case 2: in_channels != out_channels (projection shortcut), via the NCHW
    # adapter for drop-in parity with the PyTorch module interface.
    unit_b = ShuffleUnitPallas(16, 32, 1, k3)
    x_b = jax.random.normal(k4, (2, 16, 16, 16), jnp.float32).astype(jnp.bfloat16)  # NCHW
    y_b = jax.block_until_ready(unit_b.forward_nchw(x_b))
    assert y_b.shape == (2, 32, 16, 16) and y_b.dtype == jnp.bfloat16
    ref_b = unit_b.reference_nchw(x_b)
    assert jnp.allclose(y_b.astype(jnp.float32), ref_b, rtol=2e-2, atol=2e-2), \
        "proj-branch mismatch"

    print("KERNEL_OK")
</pallas_src>

<mosaic_0001>
module attributes {stable_mosaic.version = 11 : i64} {
  func.func @kernel(%arg0: i32, %arg1: memref<1x16x512xbf16, #tpu.memory_space<vmem>>, %arg2: memref<512x256xbf16, #tpu.memory_space<vmem>>, %arg3: memref<1x256xf32, #tpu.memory_space<vmem>>, %arg4: memref<9x256xf32, #tpu.memory_space<vmem>>, %arg5: memref<1x256xf32, #tpu.memory_space<vmem>>, %arg6: memref<256x512xbf16, #tpu.memory_space<vmem>>, %arg7: memref<1x512xf32, #tpu.memory_space<vmem>>, %arg8: memref<512x512xbf16, #tpu.memory_space<vmem>>, %arg9: memref<1x16x512xbf16, #tpu.memory_space<vmem>>) attributes {dimension_semantics = [#tpu.dimension_semantics<parallel>], iteration_bounds = array<i64: 2>, scalar_prefetch = 0 : i64, scratch_operands = 0 : i64, tpu.core_type = #tpu.core_type<tc>, window_params = [{transform_indices = @transform_0, window_bounds = array<i64: 1, 16, 512>}, {pipeline_mode = #tpu.pipeline_mode<synchronous>, transform_indices = @transform_1, window_bounds = array<i64: 512, 256>}, {pipeline_mode = #tpu.pipeline_mode<synchronous>, transform_indices = @transform_2, window_bounds = array<i64: 1, 256>}, {pipeline_mode = #tpu.pipeline_mode<synchronous>, transform_indices = @transform_3, window_bounds = array<i64: 9, 256>}, {pipeline_mode = #tpu.pipeline_mode<synchronous>, transform_indices = @transform_4, window_bounds = array<i64: 1, 256>}, {pipeline_mode = #tpu.pipeline_mode<synchronous>, transform_indices = @transform_5, window_bounds = array<i64: 256, 512>}, {pipeline_mode = #tpu.pipeline_mode<synchronous>, transform_indices = @transform_6, window_bounds = array<i64: 1, 512>}, {pipeline_mode = #tpu.pipeline_mode<synchronous>, transform_indices = @transform_7, window_bounds = array<i64: 512, 512>}, {transform_indices = @transform_8, window_bounds = array<i64: 1, 16, 512>}]} {
    %c0 = arith.constant 0 : index
    %c0_0 = arith.constant 0 : index
    %c0_1 = arith.constant 0 : index
    %0 = vector.load %arg1[%c0, %c0_0, %c0_1] : memref<1x16x512xbf16, #tpu.memory_space<vmem>>, vector<1x16x512xbf16>
    %1 = vector.shape_cast %0 : vector<1x16x512xbf16> to vector<16x512xbf16>
    %c0_2 = arith.constant 0 : index
    %c0_3 = arith.constant 0 : index
    %2 = vector.load %arg2[%c0_2, %c0_3] : memref<512x256xbf16, #tpu.memory_space<vmem>>, vector<512x256xbf16>
    %cst = arith.constant dense<0.000000e+00> : vector<16x256xf32>
    %3 = tpu.matmul %1, %2, %cst {dimension_numbers = #tpu.dot_dimension_numbers<[1], [0], [0], [1], [0, 0, 1, 1], [], []>} : vector<16x512xbf16>, vector<512x256xbf16>, vector<16x256xf32> -> vector<16x256xf32>
    %c0_4 = arith.constant 0 : index
    %c0_5 = arith.constant 0 : index
    %4 = vector.load %arg3[%c0_4, %c0_5] : memref<1x256xf32, #tpu.memory_space<vmem>>, vector<1x256xf32>
    %5 = vector.broadcast %4 : vector<1x256xf32> to vector<16x256xf32>
    %6 = arith.addf %3, %5 : vector<16x256xf32>
    %cst_6 = arith.constant 0.000000e+00 : f32
    %7 = vector.broadcast %cst_6 : f32 to vector<16x256xf32>
    %8 = arith.maximumf %6, %7 : vector<16x256xf32>
    %c0_7 = arith.constant 0 : index
    %c0_8 = arith.constant 0 : index
    %9 = vector.load %arg4[%c0_7, %c0_8] : memref<9x256xf32, #tpu.memory_space<vmem>>, vector<9x256xf32>
    %10 = tpu.iota {dimensions = array<i32: 1>} : vector<1x256xi32>
    %11 = tpu.iota {dimensions = array<i32: 0>} : vector<16x1xi32>
    %c16_i32 = arith.constant 16 : i32
    %c0_i32 = arith.constant 0 : i32
    %12 = arith.cmpi eq, %c16_i32, %c0_i32 : i32
    %c1_i32 = arith.constant 1 : i32
    %13 = arith.select %12, %c1_i32, %c16_i32 : i32
    %14 = vector.broadcast %13 : i32 to vector<16x1xi32>
    %15 = arith.remsi %11, %14 : vector<16x1xi32>
    %c0_i32_9 = arith.constant 0 : i32
    %16 = vector.broadcast %c0_i32_9 : i32 to vector<16x1xi32>
    %17 = arith.cmpi ne, %15, %16 : vector<16x1xi32>
    %c0_i32_10 = arith.constant 0 : i32
    %18 = vector.broadcast %c0_i32_10 : i32 to vector<16x1xi32>
    %19 = arith.cmpi slt, %15, %18 : vector<16x1xi32>
    %c0_i32_11 = arith.constant 0 : i32
    %20 = arith.cmpi slt, %13, %c0_i32_11 : i32
    %21 = vector.broadcast %20 : i1 to vector<16x1xi1>
    %22 = vector.broadcast %21 : vector<16x1xi1> to vector<16x1xi1>
    %23 = arith.xori %19, %22 : vector<16x1xi1>
    %24 = arith.andi %23, %17 : vector<16x1xi1>
    %25 = vector.broadcast %13 : i32 to vector<16x1xi32>
    %26 = arith.addi %15, %25 : vector<16x1xi32>
    %27 = arith.select %24, %26, %15 : vector<16x1xi1>, vector<16x1xi32>
    %c16_i32_12 = arith.constant 16 : i32
    %28 = vector.broadcast %c16_i32_12 : i32 to vector<1x256xi32>
    %29 = arith.cmpi sge, %10, %28 : vector<1x256xi32>
    %c16_i32_13 = arith.constant 16 : i32
    %30 = tpu.dynamic_rotate %8 by %c16_i32_13 dim 1 : vector<16x256xf32>, i32 -> vector<16x256xf32>
    %cst_14 = arith.constant 0.000000e+00 : f32
    %31 = vector.shape_cast %29 : vector<1x256xi1> to vector<1x256xi1>
    %32 = vector.broadcast %31 : vector<1x256xi1> to vector<16x256xi1>
    %33 = vector.broadcast %cst_14 : f32 to vector<16x256xf32>
    %34 = arith.select %32, %30, %33 : vector<16x256xi1>, vector<16x256xf32>
    %c240_i32 = arith.constant 240 : i32
    %35 = vector.broadcast %c240_i32 : i32 to vector<1x256xi32>
    %36 = arith.cmpi slt, %10, %35 : vector<1x256xi32>
    %c240_i32_15 = arith.constant 240 : i32
    %37 = tpu.dynamic_rotate %8 by %c240_i32_15 dim 1 : vector<16x256xf32>, i32 -> vector<16x256xf32>
    %cst_16 = arith.constant 0.000000e+00 : f32
    %38 = vector.shape_cast %36 : vector<1x256xi1> to vector<1x256xi1>
    %39 = vector.broadcast %38 : vector<1x256xi1> to vector<16x256xi1>
    %40 = vector.broadcast %cst_16 : f32 to vector<16x256xf32>
    %41 = arith.select %39, %37, %40 : vector<16x256xi1>, vector<16x256xf32>
    %42 = vector.extract_strided_slice %9 {offsets = [0, 0], sizes = [1, 256], strides = [1, 1]} : vector<9x256xf32> to vector<1x256xf32>
    %43 = vector.shape_cast %42 : vector<1x256xf32> to vector<256xf32>
    %44 = vector.shape_cast %43 : vector<256xf32> to vector<1x256xf32>
    %45 = vector.broadcast %44 : vector<1x256xf32> to vector<16x256xf32>
    %46 = arith.mulf %45, %34 : vector<16x256xf32>
    %47 = vector.extract_strided_slice %9 {offsets = [1, 0], sizes = [1, 256], strides = [1, 1]} : vector<9x256xf32> to vector<1x256xf32>
    %48 = vector.shape_cast %47 : vector<1x256xf32> to vector<256xf32>
    %49 = vector.shape_cast %48 : vector<256xf32> to vector<1x256xf32>
    %50 = vector.broadcast %49 : vector<1x256xf32> to vector<16x256xf32>
    %51 = arith.mulf %50, %8 : vector<16x256xf32>
    %52 = arith.addf %46, %51 : vector<16x256xf32>
    %53 = vector.extract_strided_slice %9 {offsets = [2, 0], sizes = [1, 256], strides = [1, 1]} : vector<9x256xf32> to vector<1x256xf32>
    %54 = vector.shape_cast %53 : vector<1x256xf32> to vector<256xf32>
    %55 = vector.shape_cast %54 : vector<256xf32> to vector<1x256xf32>
    %56 = vector.broadcast %55 : vector<1x256xf32> to vector<16x256xf32>
    %57 = arith.mulf %56, %41 : vector<16x256xf32>
    %58 = arith.addf %52, %57 : vector<16x256xf32>
    %59 = vector.extract_strided_slice %9 {offsets = [3, 0], sizes = [1, 256], strides = [1, 1]} : vector<9x256xf32> to vector<1x256xf32>
    %60 = vector.shape_cast %59 : vector<1x256xf32> to vector<256xf32>
    %61 = vector.shape_cast %60 : vector<256xf32> to vector<1x256xf32>
    %62 = vector.broadcast %61 : vector<1x256xf32> to vector<16x256xf32>
    %63 = arith.mulf %62, %34 : vector<16x256xf32>
    %64 = vector.extract_strided_slice %9 {offsets = [4, 0], sizes = [1, 256], strides = [1, 1]} : vector<9x256xf32> to vector<1x256xf32>
    %65 = vector.shape_cast %64 : vector<1x256xf32> to vector<256xf32>
    %66 = vector.shape_cast %65 : vector<256xf32> to vector<1x256xf32>
    %67 = vector.broadcast %66 : vector<1x256xf32> to vector<16x256xf32>
    %68 = arith.mulf %67, %8 : vector<16x256xf32>
    %69 = arith.addf %63, %68 : vector<16x256xf32>
    %70 = vector.extract_strided_slice %9 {offsets = [5, 0], sizes = [1, 256], strides = [1, 1]} : vector<9x256xf32> to vector<1x256xf32>
    %71 = vector.shape_cast %70 : vector<1x256xf32> to vector<256xf32>
    %72 = vector.shape_cast %71 : vector<256xf32> to vector<1x256xf32>
    %73 = vector.broadcast %72 : vector<1x256xf32> to vector<16x256xf32>
    %74 = arith.mulf %73, %41 : vector<16x256xf32>
    %75 = arith.addf %69, %74 : vector<16x256xf32>
    %76 = vector.extract_strided_slice %9 {offsets = [6, 0], sizes = [1, 256], strides = [1, 1]} : vector<9x256xf32> to vector<1x256xf32>
    %77 = vector.shape_cast %76 : vector<1x256xf32> to vector<256xf32>
    %78 = vector.shape_cast %77 : vector<256xf32> to vector<1x256xf32>
    %79 = vector.broadcast %78 : vector<1x256xf32> to vector<16x256xf32>
    %80 = arith.mulf %79, %34 : vector<16x256xf32>
    %81 = vector.extract_strided_slice %9 {offsets = [7, 0], sizes = [1, 256], strides = [1, 1]} : vector<9x256xf32> to vector<1x256xf32>
    %82 = vector.shape_cast %81 : vector<1x256xf32> to vector<256xf32>
    %83 = vector.shape_cast %82 : vector<256xf32> to vector<1x256xf32>
    %84 = vector.broadcast %83 : vector<1x256xf32> to vector<16x256xf32>
    %85 = arith.mulf %84, %8 : vector<16x256xf32>
    %86 = arith.addf %80, %85 : vector<16x256xf32>
    %87 = vector.extract_strided_slice %9 {offsets = [8, 0], sizes = [1, 256], strides = [1, 1]} : vector<9x256xf32> to vector<1x256xf32>
    %88 = vector.shape_cast %87 : vector<1x256xf32> to vector<256xf32>
    %89 = vector.shape_cast %88 : vector<256xf32> to vector<1x256xf32>
    %90 = vector.broadcast %89 : vector<1x256xf32> to vector<16x256xf32>
    %91 = arith.mulf %90, %41 : vector<16x256xf32>
    %92 = arith.addf %86, %91 : vector<16x256xf32>
    %c0_i32_17 = arith.constant 0 : i32
    %93 = vector.broadcast %c0_i32_17 : i32 to vector<16x1xi32>
    %94 = arith.cmpi sgt, %27, %93 : vector<16x1xi32>
    %c1_i32_18 = arith.constant 1 : i32
    %95 = tpu.dynamic_rotate %58 by %c1_i32_18 dim 0 : vector<16x256xf32>, i32 -> vector<16x256xf32>
    %cst_19 = arith.constant 0.000000e+00 : f32
    %96 = vector.shape_cast %94 : vector<16x1xi1> to vector<16x1xi1>
    %97 = vector.broadcast %96 : vector<16x1xi1> to vector<16x256xi1>
    %98 = vector.broadcast %cst_19 : f32 to vector<16x256xf32>
    %99 = arith.select %97, %95, %98 : vector<16x256xi1>, vector<16x256xf32>
    %c15_i32 = arith.constant 15 : i32
    %100 = vector.broadcast %c15_i32 : i32 to vector<16x1xi32>
    %101 = arith.cmpi slt, %27, %100 : vector<16x1xi32>
    %c15_i32_20 = arith.constant 15 : i32
    %102 = tpu.dynamic_rotate %92 by %c15_i32_20 dim 0 : vector<16x256xf32>, i32 -> vector<16x256xf32>
    %cst_21 = arith.constant 0.000000e+00 : f32
    %103 = vector.shape_cast %101 : vector<16x1xi1> to vector<16x1xi1>
    %104 = vector.broadcast %103 : vector<16x1xi1> to vector<16x256xi1>
    %105 = vector.broadcast %cst_21 : f32 to vector<16x256xf32>
    %106 = arith.select %104, %102, %105 : vector<16x256xi1>, vector<16x256xf32>
    %c0_22 = arith.constant 0 : index
    %c0_23 = arith.constant 0 : index
    %107 = vector.load %arg5[%c0_22, %c0_23] : memref<1x256xf32, #tpu.memory_space<vmem>>, vector<1x256xf32>
    %108 = vector.broadcast %107 : vector<1x256xf32> to vector<16x256xf32>
    %109 = arith.addf %75, %108 : vector<16x256xf32>
    %110 = arith.addf %109, %99 : vector<16x256xf32>
    %111 = arith.addf %110, %106 : vector<16x256xf32>
    %112 = arith.truncf %111 : vector<16x256xf32> to vector<16x256xbf16>
    %c0_24 = arith.constant 0 : index
    %c0_25 = arith.constant 0 : index
    %113 = vector.load %arg6[%c0_24, %c0_25] : memref<256x512xbf16, #tpu.memory_space<vmem>>, vector<256x512xbf16>
    %cst_26 = arith.constant dense<0.000000e+00> : vector<16x512xf32>
    %114 = tpu.matmul %112, %113, %cst_26 {dimension_numbers = #tpu.dot_dimension_numbers<[1], [0], [0], [1], [0, 0, 1, 1], [], []>} : vector<16x256xbf16>, vector<256x512xbf16>, vector<16x512xf32> -> vector<16x512xf32>
    %c0_27 = arith.constant 0 : index
    %c0_28 = arith.constant 0 : index
    %115 = vector.load %arg7[%c0_27, %c0_28] : memref<1x512xf32, #tpu.memory_space<vmem>>, vector<1x512xf32>
    %116 = vector.broadcast %115 : vector<1x512xf32> to vector<16x512xf32>
    %117 = arith.addf %114, %116 : vector<16x512xf32>
    %cst_29 = arith.constant 0.000000e+00 : f32
    %118 = vector.broadcast %cst_29 : f32 to vector<16x512xf32>
    %119 = arith.maximumf %117, %118 : vector<16x512xf32>
    %c0_30 = arith.constant 0 : index
    %c0_31 = arith.constant 0 : index
    %120 = vector.load %arg8[%c0_30, %c0_31] : memref<512x512xbf16, #tpu.memory_space<vmem>>, vector<512x512xbf16>
    %cst_32 = arith.constant dense<0.000000e+00> : vector<16x512xf32>
    %121 = tpu.matmul %1, %120, %cst_32 {dimension_numbers = #tpu.dot_dimension_numbers<[1], [0], [0], [1], [0, 0, 1, 1], [], []>} : vector<16x512xbf16>, vector<512x512xbf16>, vector<16x512xf32> -> vector<16x512xf32>
    %122 = arith.addf %119, %121 : vector<16x512xf32>
    %123 = vector.shape_cast %122 : vector<16x512xf32> to vector<1x16x512xf32>
    %124 = arith.truncf %123 : vector<1x16x512xf32> to vector<1x16x512xbf16>
    %c0_33 = arith.constant 0 : index
    %c0_34 = arith.constant 0 : index
    %c0_35 = arith.constant 0 : index
    %125 = vector.load %arg9[%c0_33, %c0_34, %c0_35] : memref<1x16x512xbf16, #tpu.memory_space<vmem>>, vector<1x16x512xbf16>
    tpu.vector_store %arg9[%c0_33, %c0_34, %c0_35], %124 {strides = array<i32>} : memref<1x16x512xbf16, #tpu.memory_space<vmem>>, vector<1x16x512xbf16>,
    return
  }
  func.func @transform_0(%arg0: i32) -> (i32, i32, i32) {
    %c0_i32 = arith.constant 0 : i32
    %c0_i32_0 = arith.constant 0 : i32
    %c0_i32_1 = arith.constant 0 : i32
    return %arg0, %c0_i32, %c0_i32_0 : i32, i32, i32
  }
  func.func @transform_1(%arg0: i32) -> (i32, i32) {
    %c0_i32 = arith.constant 0 : i32
    %c0_i32_0 = arith.constant 0 : i32
    %c0_i32_1 = arith.constant 0 : i32
    return %c0_i32, %c0_i32_0 : i32, i32
  }
  func.func @transform_2(%arg0: i32) -> (i32, i32) {
    %c0_i32 = arith.constant 0 : i32
    %c0_i32_0 = arith.constant 0 : i32
    %c0_i32_1 = arith.constant 0 : i32
    return %c0_i32, %c0_i32_0 : i32, i32
  }
  func.func @transform_3(%arg0: i32) -> (i32, i32) {
    %c0_i32 = arith.constant 0 : i32
    %c0_i32_0 = arith.constant 0 : i32
    %c0_i32_1 = arith.constant 0 : i32
    return %c0_i32, %c0_i32_0 : i32, i32
  }
  func.func @transform_4(%arg0: i32) -> (i32, i32) {
    %c0_i32 = arith.constant 0 : i32
    %c0_i32_0 = arith.constant 0 : i32
    %c0_i32_1 = arith.constant 0 : i32
    return %c0_i32, %c0_i32_0 : i32, i32
  }
  func.func @transform_5(%arg0: i32) -> (i32, i32) {
    %c0_i32 = arith.constant 0 : i32
    %c0_i32_0 = arith.constant 0 : i32
    %c0_i32_1 = arith.constant 0 : i32
    return %c0_i32, %c0_i32_0 : i32, i32
  }
  func.func @transform_6(%arg0: i32) -> (i32, i32) {
    %c0_i32 = arith.constant 0 : i32
    %c0_i32_0 = arith.constant 0 : i32
    %c0_i32_1 = arith.constant 0 : i32
    return %c0_i32, %c0_i32_0 : i32, i32
  }
  func.func @transform_7(%arg0: i32) -> (i32, i32) {
    %c0_i32 = arith.constant 0 : i32
    %c0_i32_0 = arith.constant 0 : i32
    %c0_i32_1 = arith.constant 0 : i32
    return %c0_i32, %c0_i32_0 : i32, i32
  }
  func.func @transform_8(%arg0: i32) -> (i32, i32, i32) {
    %c0_i32 = arith.constant 0 : i32
    %c0_i32_0 = arith.constant 0 : i32
    %c0_i32_1 = arith.constant 0 : i32
    return %arg0, %c0_i32, %c0_i32_0 : i32, i32, i32
  }
}

</mosaic_0001>

<llo_original>
// kernel: tpu_custom_call.1
$region0: #{tpu_custom_call.1}
  #allocation0 [shape = 'u32[]', space=smem, size = 0x4, offset = 0x4, fixed_abs, tag = 'smem constant byte address 0x4 - core index']
  #allocation1 [shape = 'u32[144,128]{1,0:T(1,128)}', space=vmem, size = 0x12000, scoped, tag = 'internal scratch']
  %s0 = inlined_call_operand.hbm [shape: bf16[2,16,512], index: 0, kind: input, shape index: {}]
  %s1 = inlined_call_operand.hbm [shape: bf16[512,256], index: 1, kind: input, shape index: {}]
  %s2 = inlined_call_operand.vmem [shape: f32[1,256], index: 2, kind: input, shape index: {}]
  %s3 = inlined_call_operand.hbm [shape: f32[9,256], index: 3, kind: input, shape index: {}]
  %s4 = inlined_call_operand.vmem [shape: f32[1,256], index: 4, kind: input, shape index: {}]
  %s5 = inlined_call_operand.hbm [shape: bf16[256,512], index: 5, kind: input, shape index: {}]
  %s6 = inlined_call_operand.vmem [shape: f32[1,512], index: 6, kind: input, shape index: {}]
  %s7 = inlined_call_operand.hbm [shape: bf16[512,512], index: 7, kind: input, shape index: {}]
  %s8 = inlined_call_operand.hbm [shape: bf16[2,16,512], index: 8, kind: output, shape index: {}]
  %s9 = sld [smem:[#allocation0]]
  $region85: #{tpu_custom_call.1} parent=0
    _
  %s11 = ssub.s32 1, %s9
  %s12 = scalar_select 0, %s11, %s9
  $region1: #{tpu_custom_call.1} parent=0
    #allocation2 [shape = 'u8[32768]{0}', space=vmem, size = 0x8000, scoped, tag = 'input window, operand 0']
    #allocation3 [shape = 's32[2]{0}', space=sflag, size = 0x8, scoped, tag = 'scoped memory for tpu_custom_call.1']
    #allocation4 [shape = 's32[2]{0}', space=sflag, size = 0x8, scoped, tag = 'scoped memory for tpu_custom_call.1']
    #allocation5 [shape = 'u8[262144]{0}', space=vmem, size = 0x40000, scoped, tag = 'input window, operand 1, single buffered']
    #allocation6 [shape = 's32[1]{0}', space=sflag, size = 0x4, scoped, tag = 'scoped memory for tpu_custom_call.1']
    #allocation7 [shape = 'u8[16384]{0}', space=vmem, size = 0x4000, scoped, tag = 'input window, operand 3, single buffered']
    #allocation8 [shape = 'u8[262144]{0}', space=vmem, size = 0x40000, scoped, tag = 'input window, operand 5, single buffered']
    #allocation9 [shape = 's32[1]{0}', space=sflag, size = 0x4, scoped, tag = 'scoped memory for tpu_custom_call.1']
    #allocation10 [shape = 'u8[524288]{0}', space=vmem, size = 0x80000, scoped, tag = 'input window, operand 7, single buffered']
    #allocation11 [shape = 'u8[32768]{0}', space=vmem, size = 0x8000, scoped, tag = 'output window, operand 0']
    %13 = vsyncpa [#allocation3], 0
    %s14 = scalar_lea.sflag [#allocation3], 1
    %15 = vsyncpa %s14, 0
    %16 = vsyncpa [#allocation6], 0
    %17 = vsyncpa [#allocation9], 0
    %18 = vsyncpa [#allocation4], 0
    %s19 = scalar_lea.sflag [#allocation4], 1
    %20 = vsyncpa %s19, 0
    loop: start=0, step=1, limit=4
    $region2: #{tpu_custom_call.1} parent=1 // loop_pre_header
      _
    $region3: #{tpu_custom_call.1} parent=1 // loop_header
      %s22 = sphi 0, %s26
      %p23 = scmp.ge.s32.totalorder %s22, 4
      %s32 = sphi 0, %s34
      %s35 = sphi 0, %s32
      %s36 = sphi 0, %s35
      %s52 = sphi 0, %s36
      %s56 = sphi 0, %s56
      %s58 = sphi 0, %s56
      %s59 = sphi 0, %s58
      %s73 = sphi 0, %s59
      %s77 = sphi 0, %s77
      %s79 = sphi 0, %s77
      %s80 = sphi 0, %s79
      %s94 = sphi 0, %s80
      %s98 = sphi 0, %s98
      %s100 = sphi 0, %s98
      %s101 = sphi 0, %s100
      %s115 = sphi 0, %s101
      %s119 = sphi 0, %s119
      %s121 = sphi 0, %s119
      %s122 = sphi 0, %s121
      %s136 = sphi 0, %s122
      %s140 = sphi 0, %s140
      %s142 = sphi 0, %s140
      %s143 = sphi 0, %s142
      %s157 = sphi 0, %s143
      %s161 = sphi 0, %s161
      %s163 = sphi 0, %s161
      %s164 = sphi 0, %s163
      %s178 = sphi 0, %s164
      %s182 = sphi 0, %s182
      %s184 = sphi 0, %s182
      %s185 = sphi 0, %s184
      %s199 = sphi 0, %s185
      %s205 = sphi 0, %s207
      %s208 = sphi 0, %s205
      %s209 = sphi 0, %s208
      %s225 = sphi 0, %s209
    $region4: #{tpu_custom_call.1} parent=1 // loop_header_branch
      %25 = sbr.rel (%p23) target = $region8
    $region5: #{tpu_custom_call.1} parent=1 // loop_body
      %s27 = ssub.s32 %s22, 1
      %s28 = ssub.s32 %s22, 2
      %s29 = sadd.s32 %s22, 1
      %s30 = ssub.s32 %s22, %s29
      %p31 = scmp.eq.s32.totalorder %s30, 0
      %s33 = sadd.s32 %s32, 1
      %s34 = scalar_select %p31, %s32, %s33
      %p37 = pneg %p31
      %p38 = scmp.eq.s32.totalorder %s22, 1
      %p39 = por %p37, %p38
      %p40 = scmp.ne.s32.totalorder %s32, %s35
      %p41 = scmp.eq.s32.totalorder %s22, 0
      %p42 = por %p40, %p41
      %p43 = scmp.ne.s32.totalorder %s32, %s35
      %p44 = scmp.eq.s32.totalorder %s27, 1
      %p45 = por %p43, %p44
      %p46 = scmp.ne.s32.totalorder %s35, %s36
      %p47 = scmp.eq.s32.totalorder %s27, 0
      %p48 = por %p46, %p47
      %p49 = scmp.ne.s32.totalorder %s35, %s36
      %p50 = scmp.eq.s32.totalorder %s28, 1
      %p51 = por %p49, %p50
      %p53 = scmp.ne.s32.totalorder %s36, %s52
      %p54 = scmp.eq.s32.totalorder %s28, 0
      %p55 = por %p53, %p54
      %s57 = sadd.s32 %s56, 1
      %p60 = scmp.eq.s32.totalorder %s22, 1
      %p61 = scmp.ne.s32.totalorder %s56, %s58
      %p62 = scmp.eq.s32.totalorder %s22, 0
      %p63 = por %p61, %p62
      %p64 = scmp.ne.s32.totalorder %s56, %s58
      %p65 = scmp.eq.s32.totalorder %s27, 1
      %p66 = por %p64, %p65
      %p67 = scmp.ne.s32.totalorder %s58, %s59
      %p68 = scmp.eq.s32.totalorder %s27, 0
      %p69 = por %p67, %p68
      %p70 = scmp.ne.s32.totalorder %s58, %s59
      %p71 = scmp.eq.s32.totalorder %s28, 1
      %p72 = por %p70, %p71
      %p74 = scmp.ne.s32.totalorder %s59, %s73
      %p75 = scmp.eq.s32.totalorder %s28, 0
      %p76 = por %p74, %p75
      %s78 = sadd.s32 %s77, 1
      %p81 = scmp.eq.s32.totalorder %s22, 1
      %p82 = scmp.ne.s32.totalorder %s77, %s79
      %p83 = scmp.eq.s32.totalorder %s22, 0
      %p84 = por %p82, %p83
      %p85 = scmp.ne.s32.totalorder %s77, %s79
      %p86 = scmp.eq.s32.totalorder %s27, 1
      %p87 = por %p85, %p86
      %p88 = scmp.ne.s32.totalorder %s79, %s80
      %p89 = scmp.eq.s32.totalorder %s27, 0
      %p90 = por %p88, %p89
      %p91 = scmp.ne.s32.totalorder %s79, %s80
      %p92 = scmp.eq.s32.totalorder %s28, 1
      %p93 = por %p91, %p92
      %p95 = scmp.ne.s32.totalorder %s80, %s94
      %p96 = scmp.eq.s32.totalorder %s28, 0
      %p97 = por %p95, %p96
      %s99 = sadd.s32 %s98, 1
      %p102 = scmp.eq.s32.totalorder %s22, 1
      %p103 = scmp.ne.s32.totalorder %s98, %s100
      %p104 = scmp.eq.s32.totalorder %s22, 0
      %p105 = por %p103, %p104
      %p106 = scmp.ne.s32.totalorder %s98, %s100
      %p107 = scmp.eq.s32.totalorder %s27, 1
      %p108 = por %p106, %p107
      %p109 = scmp.ne.s32.totalorder %s100, %s101
      %p110 = scmp.eq.s32.totalorder %s27, 0
      %p111 = por %p109, %p110
      %p112 = scmp.ne.s32.totalorder %s100, %s101
      %p113 = scmp.eq.s32.totalorder %s28, 1
      %p114 = por %p112, %p113
      %p116 = scmp.ne.s32.totalorder %s101, %s115
      %p117 = scmp.eq.s32.totalorder %s28, 0
      %p118 = por %p116, %p117
      %s120 = sadd.s32 %s119, 1
      %p123 = scmp.eq.s32.totalorder %s22, 1
      %p124 = scmp.ne.s32.totalorder %s119, %s121
      %p125 = scmp.eq.s32.totalorder %s22, 0
      %p126 = por %p124, %p125
      %p127 = scmp.ne.s32.totalorder %s119, %s121
      %p128 = scmp.eq.s32.totalorder %s27, 1
      %p129 = por %p127, %p128
      %p130 = scmp.ne.s32.totalorder %s121, %s122
      %p131 = scmp.eq.s32.totalorder %s27, 0
      %p132 = por %p130, %p131
      %p133 = scmp.ne.s32.totalorder %s121, %s122
      %p134 = scmp.eq.s32.totalorder %s28, 1
      %p135 = por %p133, %p134
      %p137 = scmp.ne.s32.totalorder %s122, %s136
      %p138 = scmp.eq.s32.totalorder %s28, 0
      %p139 = por %p137, %p138
      %s141 = sadd.s32 %s140, 1
      %p144 = scmp.eq.s32.totalorder %s22, 1
      %p145 = scmp.ne.s32.totalorder %s140, %s142
      %p146 = scmp.eq.s32.totalorder %s22, 0
      %p147 = por %p145, %p146
      %p148 = scmp.ne.s32.totalorder %s140, %s142
      %p149 = scmp.eq.s32.totalorder %s27, 1
      %p150 = por %p148, %p149
      %p151 = scmp.ne.s32.totalorder %s142, %s143
      %p152 = scmp.eq.s32.totalorder %s27, 0
      %p153 = por %p151, %p152
      %p154 = scmp.ne.s32.totalorder %s142, %s143
      %p155 = scmp.eq.s32.totalorder %s28, 1
      %p156 = por %p154, %p155
      %p158 = scmp.ne.s32.totalorder %s143, %s157
      %p159 = scmp.eq.s32.totalorder %s28, 0
      %p160 = por %p158, %p159
      %s162 = sadd.s32 %s161, 1
      %p165 = scmp.eq.s32.totalorder %s22, 1
      %p166 = scmp.ne.s32.totalorder %s161, %s163
      %p167 = scmp.eq.s32.totalorder %s22, 0
      %p168 = por %p166, %p167
      %p169 = scmp.ne.s32.totalorder %s161, %s163
      %p170 = scmp.eq.s32.totalorder %s27, 1
      %p171 = por %p169, %p170
      %p172 = scmp.ne.s32.totalorder %s163, %s164
      %p173 = scmp.eq.s32.totalorder %s27, 0
      %p174 = por %p172, %p173
      %p175 = scmp.ne.s32.totalorder %s163, %s164
      %p176 = scmp.eq.s32.totalorder %s28, 1
      %p177 = por %p175, %p176
      %p179 = scmp.ne.s32.totalorder %s164, %s178
      %p180 = scmp.eq.s32.totalorder %s28, 0
      %p181 = por %p179, %p180
      %s183 = sadd.s32 %s182, 1
      %p186 = scmp.eq.s32.totalorder %s22, 1
      %p187 = scmp.ne.s32.totalorder %s182, %s184
      %p188 = scmp.eq.s32.totalorder %s22, 0
      %p189 = por %p187, %p188
      %p190 = scmp.ne.s32.totalorder %s182, %s184
      %p191 = scmp.eq.s32.totalorder %s27, 1
      %p192 = por %p190, %p191
      %p193 = scmp.ne.s32.totalorder %s184, %s185
      %p194 = scmp.eq.s32.totalorder %s27, 0
      %p195 = por %p193, %p194
      %p196 = scmp.ne.s32.totalorder %s184, %s185
      %p197 = scmp.eq.s32.totalorder %s28, 1
      %p198 = por %p196, %p197
      %p200 = scmp.ne.s32.totalorder %s185, %s199
      %p201 = scmp.eq.s32.totalorder %s28, 0
      %p202 = por %p200, %p201
      %s203 = ssub.s32 %s22, %s29
      %p204 = scmp.eq.s32.totalorder %s203, 0
      %s206 = sadd.s32 %s205, 1
      %s207 = scalar_select %p204, %s205, %s206
      %p210 = pneg %p204
      %p211 = scmp.eq.s32.totalorder %s22, 1
      %p212 = por %p210, %p211
      %p213 = scmp.ne.s32.totalorder %s205, %s208
      %p214 = scmp.eq.s32.totalorder %s22, 0
      %p215 = por %p213, %p214
      %p216 = scmp.ne.s32.totalorder %s205, %s208
      %p217 = scmp.eq.s32.totalorder %s27, 1
      %p218 = por %p216, %p217
      %p219 = scmp.ne.s32.totalorder %s208, %s209
      %p220 = scmp.eq.s32.totalorder %s27, 0
      %p221 = por %p219, %p220
      %p222 = scmp.ne.s32.totalorder %s208, %s209
      %p223 = scmp.eq.s32.totalorder %s28, 1
      %p224 = por %p222, %p223
      %p226 = scmp.ne.s32.totalorder %s209, %s225
      %p227 = scmp.eq.s32.totalorder %s28, 0
      %p228 = por %p226, %p227
      %p229 = scmp.le.s32.totalorder 1, %s22
      %p230 = scmp.lt.s32.totalorder %s22, 3
      %p231 = pnand %p229, %p230
      %p232 = pneg %p231
      // Predicated region
      $region9: #{tpu_custom_call.1} parent=5 // pred_check
        _
      $region10: #{tpu_custom_call.1} parent=5 // pred_check_branch
        %234 = sbr.rel (%p231) target = $region12
      $region11: #{tpu_custom_call.1} parent=5 // pred_region
        %s235 = ssub.s32 %s22, 1
        // Predicated region
        $region13: #{tpu_custom_call.1} parent=11 // pred_check
          %p236 = pneg %p69
        $region14: #{tpu_custom_call.1} parent=11 // pred_check_branch
          %238 = sbr.rel (%p236) target = $region16
        $region15: #{tpu_custom_call.1} parent=11 // pred_region
          %s240 = ssub.s32 8192, 8192
          %241 = vsyncadd [#allocation6], %s240
          %s242 = sshll.u32 [#allocation5], 4
          %s243 = int_to_ptr.vmem [resolvable:$true] %s242
          %248 = dma.hbm_to_vmem [thread:$0]  %s1, 8192, %s243, [#allocation6], 128, 128, 8
        $region16: #{tpu_custom_call.1} parent=11 // pred_fallthru
          _
        // Predicated region
        $region17: #{tpu_custom_call.1} parent=11 // pred_check
          %p249 = pneg %p90
        $region18: #{tpu_custom_call.1} parent=11 // pred_check_branch
          %251 = sbr.rel (%p249) target = $region20
        $region19: #{tpu_custom_call.1} parent=11 // pred_region
          _
        $region20: #{tpu_custom_call.1} parent=11 // pred_fallthru
          _
        // Predicated region
        $region21: #{tpu_custom_call.1} parent=11 // pred_check
          %p252 = pneg %p111
        $region22: #{tpu_custom_call.1} parent=11 // pred_check_branch
          %254 = sbr.rel (%p252) target = $region24
        $region23: #{tpu_custom_call.1} parent=11 // pred_region
          %s256 = ssub.s32 512, 512
          %257 = vsyncadd [#allocation6], %s256
          %s258 = sshll.u32 [#allocation7], 4
          %s259 = int_to_ptr.vmem [resolvable:$true] %s258
          %264 = dma.hbm_to_vmem [thread:$0]  %s3, 512, %s259, [#allocation6], 256, 256, 16
        $region24: #{tpu_custom_call.1} parent=11 // pred_fallthru
          _
        // Predicated region
        $region25: #{tpu_custom_call.1} parent=11 // pred_check
          %p265 = pneg %p132
        $region26: #{tpu_custom_call.1} parent=11 // pred_check_branch
          %267 = sbr.rel (%p265) target = $region28
        $region27: #{tpu_custom_call.1} parent=11 // pred_region
          _
        $region28: #{tpu_custom_call.1} parent=11 // pred_fallthru
          _
        // Predicated region
        $region29: #{tpu_custom_call.1} parent=11 // pred_check
          %p268 = pneg %p153
        $region30: #{tpu_custom_call.1} parent=11 // pred_check_branch
          %270 = sbr.rel (%p268) target = $region32
        $region31: #{tpu_custom_call.1} parent=11 // pred_region
          %s272 = ssub.s32 8192, 8192
          %273 = vsyncadd [#allocation9], %s272
          %s274 = sshll.u32 [#allocation8], 4
          %s275 = int_to_ptr.vmem [resolvable:$true] %s274
          %280 = dma.hbm_to_vmem [thread:$0]  %s5, 8192, %s275, [#allocation9], 256, 256, 16
        $region32: #{tpu_custom_call.1} parent=11 // pred_fallthru
          _
        // Predicated region
        $region33: #{tpu_custom_call.1} parent=11 // pred_check
          %p281 = pneg %p174
        $region34: #{tpu_custom_call.1} parent=11 // pred_check_branch
          %283 = sbr.rel (%p281) target = $region36
        $region35: #{tpu_custom_call.1} parent=11 // pred_region
          _
        $region36: #{tpu_custom_call.1} parent=11 // pred_fallthru
          _
        // Predicated region
        $region37: #{tpu_custom_call.1} parent=11 // pred_check
          %p284 = pneg %p195
        $region38: #{tpu_custom_call.1} parent=11 // pred_check_branch
          %286 = sbr.rel (%p284) target = $region40
        $region39: #{tpu_custom_call.1} parent=11 // pred_region
          %s288 = ssub.s32 16384, 16384
          %289 = vsyncadd [#allocation9], %s288
          %s290 = sshll.u32 [#allocation10], 4
          %s291 = int_to_ptr.vmem [resolvable:$true] %s290
          %296 = dma.hbm_to_vmem [thread:$0]  %s7, 16384, %s291, [#allocation9], 256, 256, 16
        $region40: #{tpu_custom_call.1} parent=11 // pred_fallthru
          _
      $region12: #{tpu_custom_call.1} parent=5 // pred_fallthru
        _
      %p297 = scmp.lt.s32.totalorder %s22, 2
      // Predicated region
      $region41: #{tpu_custom_call.1} parent=5 // pred_check
        %p298 = pneg %p297
      $region42: #{tpu_custom_call.1} parent=5 // pred_check_branch
        %300 = sbr.rel (%p298) target = $region44
      $region43: #{tpu_custom_call.1} parent=5 // pred_region
        // Predicated region
        $region45: #{tpu_custom_call.1} parent=43 // pred_check
          %p301 = pneg %p42
        $region46: #{tpu_custom_call.1} parent=43 // pred_check_branch
          %303 = sbr.rel (%p301) target = $region48
        $region47: #{tpu_custom_call.1} parent=43 // pred_region
          %s304 = sand.u32 %s32, 1
          %s305 = scalar_lea.sflag [#allocation3], %s304
          %s306 = sand.u32 %s32, 1
          %s307 = smul.addr %s306, 32
          %s308 = scalar_lea.vmem [#allocation2], %s307
          %s310 = ssub.s32 512, 512
          %311 = vsyncadd %s305, %s310
          %s312 = smul.addr %s22, 8
          %s313 = smul.addr %s312, 64
          %s314 = scalar_lea.hbm %s0, %s313
          %s315 = sshll.u32 %s308, 4
          %s316 = int_to_ptr.vmem [resolvable:$true] %s315
          %321 = dma.hbm_to_vmem [thread:$0]  %s314, 512, %s316, %s305, 256, 256, 16
        $region48: #{tpu_custom_call.1} parent=43 // pred_fallthru
          _
      $region44: #{tpu_custom_call.1} parent=5 // pred_fallthru
        _
      %p322 = scmp.le.s32.totalorder 1, %s22
      %p323 = scmp.lt.s32.totalorder %s22, 3
      %p324 = pnand %p322, %p323
      %p325 = pneg %p324
      // Predicated region
      $region49: #{tpu_custom_call.1} parent=5 // pred_check
        _
      $region50: #{tpu_custom_call.1} parent=5 // pred_check_branch
        %327 = sbr.rel (%p324) target = $region52
      $region51: #{tpu_custom_call.1} parent=5 // pred_region
        %s328 = ssub.s32 %s22, 1
        %s329 = sand.u32 %s35, 1
        %s330 = scalar_lea.sflag [#allocation3], %s329
        %s331 = sand.u32 %s35, 1
        %s332 = smul.addr %s331, 32
        %s333 = scalar_lea.vmem [#allocation2], %s332
        // Predicated region
        $region53: #{tpu_custom_call.1} parent=51 // pred_check
          %p334 = pneg %p48
        $region54: #{tpu_custom_call.1} parent=51 // pred_check_branch
          %336 = sbr.rel (%p334) target = $region56
        $region55: #{tpu_custom_call.1} parent=51 // pred_region
          %337 = dma.done %s330, 512
        $region56: #{tpu_custom_call.1} parent=51 // pred_fallthru
          _
        // Predicated region
        $region57: #{tpu_custom_call.1} parent=51 // pred_check
          %p338 = pneg %p69
        $region58: #{tpu_custom_call.1} parent=51 // pred_check_branch
          %340 = sbr.rel (%p338) target = $region60
        $region59: #{tpu_custom_call.1} parent=51 // pred_region
          %341 = dma.done [#allocation6], 8192
        $region60: #{tpu_custom_call.1} parent=51 // pred_fallthru
          _
        // Predicated region
        $region61: #{tpu_custom_call.1} parent=51 // pred_check
          %p342 = pneg %p111
        $region62: #{tpu_custom_call.1} parent=51 // pred_check_branch
          %344 = sbr.rel (%p342) target = $region64
        $region63: #{tpu_custom_call.1} parent=51 // pred_region
          %345 = dma.done [#allocation6], 512
        $region64: #{tpu_custom_call.1} parent=51 // pred_fallthru
          _
        // Predicated region
        $region65: #{tpu_custom_call.1} parent=51 // pred_check
          %p346 = pneg %p153
        $region66: #{tpu_custom_call.1} parent=51 // pred_check_branch
          %348 = sbr.rel (%p346) target = $region68
        $region67: #{tpu_custom_call.1} parent=51 // pred_region
          %349 = dma.done [#allocation9], 8192
        $region68: #{tpu_custom_call.1} parent=51 // pred_fallthru
          _
        // Predicated region
        $region69: #{tpu_custom_call.1} parent=51 // pred_check
          %p350 = pneg %p195
        $region70: #{tpu_custom_call.1} parent=51 // pred_check_branch
          %352 = sbr.rel (%p350) target = $region72
        $region71: #{tpu_custom_call.1} parent=51 // pred_region
          %353 = dma.done [#allocation9], 16384
        $region72: #{tpu_custom_call.1} parent=51 // pred_fallthru
          _
        %s354 = sand.u32 %s35, 1
        %s355 = scalar_lea.sflag [#allocation3], %s354
        %s356 = sand.u32 %s35, 1
        %s357 = smul.addr %s356, 32
        %s358 = scalar_lea.vmem [#allocation2], %s357
        %p359 = pneg %p48
        %p360 = pneg %p45
        %p361 = pneg %p69
        %p362 = pneg %p66
        %p363 = pneg %p90
        %p364 = pneg %p87
        %p365 = pneg %p111
        %p366 = pneg %p108
        %p367 = pneg %p132
        %p368 = pneg %p129
        %p369 = pneg %p153
        %p370 = pneg %p150
        %p371 = pneg %p174
        %p372 = pneg %p171
        %p373 = pneg %p195
        %p374 = pneg %p192
        %p375 = pneg %p221
        %p376 = pneg %p218
        %s377 = sand.u32 %s208, 1
        %s378 = scalar_lea.sflag [#allocation4], %s377
        %s379 = sand.u32 %s208, 1
        %s380 = smul.addr %s379, 32
        %s381 = scalar_lea.vmem [#allocation11], %s380
        %v382 = vld [vmem:[%s333] sm:$0xff]
        %v383 = vld [vmem:[%s333 + $0x8] sm:$0xff]
        %v384 = vld [vmem:[%s333 + $0x10] sm:$0xff]
        %v385 = vld [vmem:[%s333 + $0x18] sm:$0xff]
        %v386 = vld [vmem:[#allocation5] sm:$0xff]
        %v387 = vld [vmem:[#allocation5 + $0x8] sm:$0xff]
        %v388 = vld [vmem:[#allocation5 + $0x10] sm:$0xff]
        %v389 = vld [vmem:[#allocation5 + $0x18] sm:$0xff]
        %v390 = vld [vmem:[#allocation5 + $0x20] sm:$0xff]
        %v391 = vld [vmem:[#allocation5 + $0x28] sm:$0xff]
        %v392 = vld [vmem:[#allocation5 + $0x30] sm:$0xff]
        %v393 = vld [vmem:[#allocation5 + $0x38] sm:$0xff]
        %v394 = vld [vmem:[#allocation5 + $0x40] sm:$0xff]
        %v395 = vld [vmem:[#allocation5 + $0x48] sm:$0xff]
        %v396 = vld [vmem:[#allocation5 + $0x50] sm:$0xff]
        %v397 = vld [vmem:[#allocation5 + $0x58] sm:$0xff]
        %v398 = vld [vmem:[#allocation5 + $0x60] sm:$0xff]
        %v399 = vld [vmem:[#allocation5 + $0x68] sm:$0xff]
        %v400 = vld [vmem:[#allocation5 + $0x70] sm:$0xff]
        %v401 = vld [vmem:[#allocation5 + $0x78] sm:$0xff]
        %v402 = vld [vmem:[#allocation5 + $0x80] sm:$0xff]
        %v403 = vld [vmem:[#allocation5 + $0x88] sm:$0xff]
        %v404 = vld [vmem:[#allocation5 + $0x90] sm:$0xff]
        %v405 = vld [vmem:[#allocation5 + $0x98] sm:$0xff]
        %v406 = vld [vmem:[#allocation5 + $0xa0] sm:$0xff]
        %v407 = vld [vmem:[#allocation5 + $0xa8] sm:$0xff]
        %v408 = vld [vmem:[#allocation5 + $0xb0] sm:$0xff]
        %v409 = vld [vmem:[#allocation5 + $0xb8] sm:$0xff]
        %v410 = vld [vmem:[#allocation5 + $0xc0] sm:$0xff]
        %v411 = vld [vmem:[#allocation5 + $0xc8] sm:$0xff]
        %v412 = vld [vmem:[#allocation5 + $0xd0] sm:$0xff]
        %v413 = vld [vmem:[#allocation5 + $0xd8] sm:$0xff]
        %v414 = vld [vmem:[#allocation5 + $0xe0] sm:$0xff]
        %v415 = vld [vmem:[#allocation5 + $0xe8] sm:$0xff]
        %v416 = vld [vmem:[#allocation5 + $0xf0] sm:$0xff]
        %v417 = vld [vmem:[#allocation5 + $0xf8] sm:$0xff]
        %v418 = vld [vmem:[#allocation5 + $0x100] sm:$0xff]
        %v419 = vld [vmem:[#allocation5 + $0x108] sm:$0xff]
        %v420 = vld [vmem:[#allocation5 + $0x110] sm:$0xff]
        %v421 = vld [vmem:[#allocation5 + $0x118] sm:$0xff]
        %v422 = vld [vmem:[#allocation5 + $0x120] sm:$0xff]
        %v423 = vld [vmem:[#allocation5 + $0x128] sm:$0xff]
        %v424 = vld [vmem:[#allocation5 + $0x130] sm:$0xff]
        %v425 = vld [vmem:[#allocation5 + $0x138] sm:$0xff]
        %v426 = vld [vmem:[#allocation5 + $0x140] sm:$0xff]
        %v427 = vld [vmem:[#allocation5 + $0x148] sm:$0xff]
        %v428 = vld [vmem:[#allocation5 + $0x150] sm:$0xff]
        %v429 = vld [vmem:[#allocation5 + $0x158] sm:$0xff]
        %v430 = vld [vmem:[#allocation5 + $0x160] sm:$0xff]
        %v431 = vld [vmem:[#allocation5 + $0x168] sm:$0xff]
        %v432 = vld [vmem:[#allocation5 + $0x170] sm:$0xff]
        %v433 = vld [vmem:[#allocation5 + $0x178] sm:$0xff]
        %v434 = vld [vmem:[#allocation5 + $0x180] sm:$0xff]
        %v435 = vld [vmem:[#allocation5 + $0x188] sm:$0xff]
        %v436 = vld [vmem:[#allocation5 + $0x190] sm:$0xff]
        %v437 = vld [vmem:[#allocation5 + $0x198] sm:$0xff]
        %v438 = vld [vmem:[#allocation5 + $0x1a0] sm:$0xff]
        %v439 = vld [vmem:[#allocation5 + $0x1a8] sm:$0xff]
        %v440 = vld [vmem:[#allocation5 + $0x1b0] sm:$0xff]
        %v441 = vld [vmem:[#allocation5 + $0x1b8] sm:$0xff]
        %v442 = vld [vmem:[#allocation5 + $0x1c0] sm:$0xff]
        %v443 = vld [vmem:[#allocation5 + $0x1c8] sm:$0xff]
        %v444 = vld [vmem:[#allocation5 + $0x1d0] sm:$0xff]
        %v445 = vld [vmem:[#allocation5 + $0x1d8] sm:$0xff]
        %v446 = vld [vmem:[#allocation5 + $0x1e0] sm:$0xff]
        %v447 = vld [vmem:[#allocation5 + $0x1e8] sm:$0xff]
        %v448 = vld [vmem:[#allocation5 + $0x1f0] sm:$0xff]
        %v449 = vld [vmem:[#allocation5 + $0x1f8] sm:$0xff]
        %v450 = vld [vmem:[%s2] sm:$0x3]
        %v452 = vlaneseq
        %v453 = vshrl.u32 %v452, 7
        %v454 = vsub.s32 0, %v453
        %v455 = vrot.slane %v450, %v454
        %v456 = vlaneseq
        %v457 = vshrl.u32 %v456, 7
        %v458 = vsub.s32 1, %v457
        %v459 = vrot.slane %v450, %v458
        %v466 = vunpack.c.l.b16 %v382
        %v467 = vunpack.c.h.b16 %v382
        %v468 = vunpack.c.l.b16 %v383
        %v469 = vunpack.c.h.b16 %v383
        %v470 = vunpack.c.l.b16 %v384
        %v471 = vunpack.c.h.b16 %v384
        %v472 = vunpack.c.l.b16 %v385
        %v473 = vunpack.c.h.b16 %v385
        %v474 = vpack.c.b16 %v470, %v466
        %v475 = vpack.c.b16 %v471, %v467
        %v476 = vpack.c.b16 %v472, %v468
        %v477 = vpack.c.b16 %v473, %v469
        %v546 = vunpack.c.l.b16 %v386
        %v547 = vunpack.c.h.b16 %v386
        %v548 = vunpack.c.l.b16 %v387
        %v549 = vunpack.c.h.b16 %v387
        %v550 = vunpack.c.l.b16 %v388
        %v551 = vunpack.c.h.b16 %v388
        %v552 = vunpack.c.l.b16 %v389
        %v553 = vunpack.c.h.b16 %v389
        %v554 = vunpack.c.l.b16 %v390
        %v555 = vunpack.c.h.b16 %v390
        %v556 = vunpack.c.l.b16 %v391
        %v557 = vunpack.c.h.b16 %v391
        %v558 = vunpack.c.l.b16 %v392
        %v559 = vunpack.c.h.b16 %v392
        %v560 = vunpack.c.l.b16 %v393
        %v561 = vunpack.c.h.b16 %v393
        %v562 = vunpack.c.l.b16 %v394
        %v563 = vunpack.c.h.b16 %v394
        %v564 = vunpack.c.l.b16 %v395
        %v565 = vunpack.c.h.b16 %v395
        %v566 = vunpack.c.l.b16 %v396
        %v567 = vunpack.c.h.b16 %v396
        %v568 = vunpack.c.l.b16 %v397
        %v569 = vunpack.c.h.b16 %v397
        %v570 = vunpack.c.l.b16 %v398
        %v571 = vunpack.c.h.b16 %v398
        %v572 = vunpack.c.l.b16 %v399
        %v573 = vunpack.c.h.b16 %v399
        %v574 = vunpack.c.l.b16 %v400
        %v575 = vunpack.c.h.b16 %v400
        %v576 = vunpack.c.l.b16 %v401
        %v577 = vunpack.c.h.b16 %v401
        %v578 = vunpack.c.l.b16 %v402
        %v579 = vunpack.c.h.b16 %v402
        %v580 = vunpack.c.l.b16 %v403
        %v581 = vunpack.c.h.b16 %v403
        %v582 = vunpack.c.l.b16 %v404
        %v583 = vunpack.c.h.b16 %v404
        %v584 = vunpack.c.l.b16 %v405
        %v585 = vunpack.c.h.b16 %v405
        %v586 = vunpack.c.l.b16 %v406
        %v587 = vunpack.c.h.b16 %v406
        %v588 = vunpack.c.l.b16 %v407
        %v589 = vunpack.c.h.b16 %v407
        %v590 = vunpack.c.l.b16 %v408
        %v591 = vunpack.c.h.b16 %v408
        %v592 = vunpack.c.l.b16 %v409
        %v593 = vunpack.c.h.b16 %v409
        %v594 = vunpack.c.l.b16 %v410
        %v595 = vunpack.c.h.b16 %v410
        %v596 = vunpack.c.l.b16 %v411
        %v597 = vunpack.c.h.b16 %v411
        %v598 = vunpack.c.l.b16 %v412
        %v599 = vunpack.c.h.b16 %v412
        %v600 = vunpack.c.l.b16 %v413
        %v601 = vunpack.c.h.b16 %v413
        %v602 = vunpack.c.l.b16 %v414
        %v603 = vunpack.c.h.b16 %v414
        %v604 = vunpack.c.l.b16 %v415
        %v605 = vunpack.c.h.b16 %v415
        %v606 = vunpack.c.l.b16 %v416
        %v607 = vunpack.c.h.b16 %v416
        %v608 = vunpack.c.l.b16 %v417
        %v609 = vunpack.c.h.b16 %v417
        %v610 = vunpack.c.l.b16 %v418
        %v611 = vunpack.c.h.b16 %v418
        %v612 = vunpack.c.l.b16 %v419
        %v613 = vunpack.c.h.b16 %v419
        %v614 = vunpack.c.l.b16 %v420
        %v615 = vunpack.c.h.b16 %v420
        %v616 = vunpack.c.l.b16 %v421
        %v617 = vunpack.c.h.b16 %v421
        %v618 = vunpack.c.l.b16 %v422
        %v619 = vunpack.c.h.b16 %v422
        %v620 = vunpack.c.l.b16 %v423
        %v621 = vunpack.c.h.b16 %v423
        %v622 = vunpack.c.l.b16 %v424
        %v623 = vunpack.c.h.b16 %v424
        %v624 = vunpack.c.l.b16 %v425
        %v625 = vunpack.c.h.b16 %v425
        %v626 = vunpack.c.l.b16 %v426
        %v627 = vunpack.c.h.b16 %v426
        %v628 = vunpack.c.l.b16 %v427
        %v629 = vunpack.c.h.b16 %v427
        %v630 = vunpack.c.l.b16 %v428
        %v631 = vunpack.c.h.b16 %v428
        %v632 = vunpack.c.l.b16 %v429
        %v633 = vunpack.c.h.b16 %v429
        %v634 = vunpack.c.l.b16 %v430
        %v635 = vunpack.c.h.b16 %v430
        %v636 = vunpack.c.l.b16 %v431
        %v637 = vunpack.c.h.b16 %v431
        %v638 = vunpack.c.l.b16 %v432
        %v639 = vunpack.c.h.b16 %v432
        %v640 = vunpack.c.l.b16 %v433
        %v641 = vunpack.c.h.b16 %v433
        %v642 = vunpack.c.l.b16 %v434
        %v643 = vunpack.c.h.b16 %v434
        %v644 = vunpack.c.l.b16 %v435
        %v645 = vunpack.c.h.b16 %v435
        %v646 = vunpack.c.l.b16 %v436
        %v647 = vunpack.c.h.b16 %v436
        %v648 = vunpack.c.l.b16 %v437
        %v649 = vunpack.c.h.b16 %v437
        %v650 = vunpack.c.l.b16 %v438
        %v651 = vunpack.c.h.b16 %v438
        %v652 = vunpack.c.l.b16 %v439
        %v653 = vunpack.c.h.b16 %v439
        %v654 = vunpack.c.l.b16 %v440
        %v655 = vunpack.c.h.b16 %v440
        %v656 = vunpack.c.l.b16 %v441
        %v657 = vunpack.c.h.b16 %v441
        %v658 = vunpack.c.l.b16 %v442
        %v659 = vunpack.c.h.b16 %v442
        %v660 = vunpack.c.l.b16 %v443
        %v661 = vunpack.c.h.b16 %v443
        %v662 = vunpack.c.l.b16 %v444
        %v663 = vunpack.c.h.b16 %v444
        %v664 = vunpack.c.l.b16 %v445
        %v665 = vunpack.c.h.b16 %v445
        %v666 = vunpack.c.l.b16 %v446
        %v667 = vunpack.c.h.b16 %v446
        %v668 = vunpack.c.l.b16 %v447
        %v669 = vunpack.c.h.b16 %v447
        %v670 = vunpack.c.l.b16 %v448
        %v671 = vunpack.c.h.b16 %v448
        %v672 = vunpack.c.l.b16 %v449
        %v673 = vunpack.c.h.b16 %v449
        %v674 = vpack.c.b16 %v548, %v546
        %v675 = vpack.c.b16 %v549, %v547
        %v676 = vpack.c.b16 %v552, %v550
        %v677 = vpack.c.b16 %v553, %v551
        %v678 = vpack.c.b16 %v556, %v554
        %v679 = vpack.c.b16 %v557, %v555
        %v680 = vpack.c.b16 %v560, %v558
        %v681 = vpack.c.b16 %v561, %v559
        %v682 = vpack.c.b16 %v564, %v562
        %v683 = vpack.c.b16 %v565, %v563
        %v684 = vpack.c.b16 %v568, %v566
        %v685 = vpack.c.b16 %v569, %v567
        %v686 = vpack.c.b16 %v572, %v570
        %v687 = vpack.c.b16 %v573, %v571
        %v688 = vpack.c.b16 %v576, %v574
        %v689 = vpack.c.b16 %v577, %v575
        %v690 = vpack.c.b16 %v580, %v578
        %v691 = vpack.c.b16 %v581, %v579
        %v692 = vpack.c.b16 %v584, %v582
        %v693 = vpack.c.b16 %v585, %v583
        %v694 = vpack.c.b16 %v588, %v586
        %v695 = vpack.c.b16 %v589, %v587
        %v696 = vpack.c.b16 %v592, %v590
        %v697 = vpack.c.b16 %v593, %v591
        %v698 = vpack.c.b16 %v596, %v594
        %v699 = vpack.c.b16 %v597, %v595
        %v700 = vpack.c.b16 %v600, %v598
        %v701 = vpack.c.b16 %v601, %v599
        %v702 = vpack.c.b16 %v604, %v602
        %v703 = vpack.c.b16 %v605, %v603
        %v704 = vpack.c.b16 %v608, %v606
        %v705 = vpack.c.b16 %v609, %v607
        %v706 = vpack.c.b16 %v612, %v610
        %v707 = vpack.c.b16 %v613, %v611
        %v708 = vpack.c.b16 %v616, %v614
        %v709 = vpack.c.b16 %v617, %v615
        %v710 = vpack.c.b16 %v620, %v618
        %v711 = vpack.c.b16 %v621, %v619
        %v712 = vpack.c.b16 %v624, %v622
        %v713 = vpack.c.b16 %v625, %v623
        %v714 = vpack.c.b16 %v628, %v626
        %v715 = vpack.c.b16 %v629, %v627
        %v716 = vpack.c.b16 %v632, %v630
        %v717 = vpack.c.b16 %v633, %v631
        %v718 = vpack.c.b16 %v636, %v634
        %v719 = vpack.c.b16 %v637, %v635
        %v720 = vpack.c.b16 %v640, %v638
        %v721 = vpack.c.b16 %v641, %v639
        %v722 = vpack.c.b16 %v644, %v642
        %v723 = vpack.c.b16 %v645, %v643
        %v724 = vpack.c.b16 %v648, %v646
        %v725 = vpack.c.b16 %v649, %v647
        %v726 = vpack.c.b16 %v652, %v650
        %v727 = vpack.c.b16 %v653, %v651
        %v728 = vpack.c.b16 %v656, %v654
        %v729 = vpack.c.b16 %v657, %v655
        %v730 = vpack.c.b16 %v660, %v658
        %v731 = vpack.c.b16 %v661, %v659
        %v732 = vpack.c.b16 %v664, %v662
        %v733 = vpack.c.b16 %v665, %v663
        %v734 = vpack.c.b16 %v668, %v666
        %v735 = vpack.c.b16 %v669, %v667
        %v736 = vpack.c.b16 %v672, %v670
        %v737 = vpack.c.b16 %v673, %v671
        %802 = vmatprep.subr.bf16.mxu0 %v675
        %803 = vmatpush1.bf16.msra.mxu0 %v674
        %804 = vmatprep.subr.bf16.mxu0 %v677
        %805 = vmatpush1.bf16.msra.mxu0 %v676
        %806 = vmatprep.subr.bf16.mxu0 %v679
        %807 = vmatpush1.bf16.msra.mxu0 %v678
        %808 = vmatprep.subr.bf16.mxu0 %v681
        %809 = vmatpush1.bf16.msra.mxu0 %v680
        %810 = vmatprep.subr.bf16.mxu0 %v683
        %811 = vmatpush1.bf16.msra.mxu0 %v682
        %812 = vmatprep.subr.bf16.mxu0 %v685
        %813 = vmatpush1.bf16.msra.mxu0 %v684
        %814 = vmatprep.subr.bf16.mxu0 %v687
        %815 = vmatpush1.bf16.msra.mxu0 %v686
        %816 = vmatprep.subr.bf16.mxu0 %v689
        %817 = vmatpush1.bf16.msra.mxu0 %v688
        %818 = vmatprep.subr.bf16.mxu0 %v691
        %819 = vmatpush1.bf16.msra.mxu0 %v690
        %820 = vmatprep.subr.bf16.mxu0 %v693
        %821 = vmatpush1.bf16.msra.mxu0 %v692
        %822 = vmatprep.subr.bf16.mxu0 %v695
        %823 = vmatpush1.bf16.msra.mxu0 %v694
        %824 = vmatprep.subr.bf16.mxu0 %v697
        %825 = vmatpush1.bf16.msra.mxu0 %v696
        %826 = vmatprep.subr.bf16.mxu0 %v699
        %827 = vmatpush1.bf16.msra.mxu0 %v698
        %828 = vmatprep.subr.bf16.mxu0 %v701
        %829 = vmatpush1.bf16.msra.mxu0 %v700
        %830 = vmatprep.subr.bf16.mxu0 %v703
        %831 = vmatpush1.bf16.msra.mxu0 %v702
        %832 = vmatprep.subr.bf16.mxu0 %v705
        %833 = vmatpush1.bf16.msra.mxu0 %v704
        %834 = vmatprep.mubr.bf16.mxu0 %v475
        %835 = vmatmul.mubr.bf16.gmra.mrb[0].mxu0 %v474
        %v836 = vpop.f32.mrb[0].mxu0
        %v837 = vadd.f32 %v455, %v836
        %v838 = vpop.f32.mrb[0].mxu0
        %v839 = vadd.f32 %v459, %v838
        %v840 = vpop.f32.mrb[0].mxu0
        %v841 = vadd.f32 %v455, %v840
        %v842 = vpop.f32.mrb[0].mxu0
        %v843 = vadd.f32 %v459, %v842
        %844 = vdwg.mxu0
        %845 = vmatprep.subr.bf16.mxu0 %v707
        %846 = vmatpush1.bf16.msra.mxu0 %v706
        %847 = vmatprep.subr.bf16.mxu0 %v709
        %848 = vmatpush1.bf16.msra.mxu0 %v708
        %849 = vmatprep.subr.bf16.mxu0 %v711
        %850 = vmatpush1.bf16.msra.mxu0 %v710
        %851 = vmatprep.subr.bf16.mxu0 %v713
        %852 = vmatpush1.bf16.msra.mxu0 %v712
        %853 = vmatprep.subr.bf16.mxu0 %v715
        %854 = vmatpush1.bf16.msra.mxu0 %v714
        %855 = vmatprep.subr.bf16.mxu0 %v717
        %856 = vmatpush1.bf16.msra.mxu0 %v716
        %857 = vmatprep.subr.bf16.mxu0 %v719
        %858 = vmatpush1.bf16.msra.mxu0 %v718
        %859 = vmatprep.subr.bf16.mxu0 %v721
        %860 = vmatpush1.bf16.msra.mxu0 %v720
        %861 = vmatprep.subr.bf16.mxu0 %v723
        %862 = vmatpush1.bf16.msra.mxu0 %v722
        %863 = vmatprep.subr.bf16.mxu0 %v725
        %864 = vmatpush1.bf16.msra.mxu0 %v724
        %865 = vmatprep.subr.bf16.mxu0 %v727
        %866 = vmatpush1.bf16.msra.mxu0 %v726
        %867 = vmatprep.subr.bf16.mxu0 %v729
        %868 = vmatpush1.bf16.msra.mxu0 %v728
        %869 = vmatprep.subr.bf16.mxu0 %v731
        %870 = vmatpush1.bf16.msra.mxu0 %v730
        %871 = vmatprep.subr.bf16.mxu0 %v733
        %872 = vmatpush1.bf16.msra.mxu0 %v732
        %873 = vmatprep.subr.bf16.mxu0 %v735
        %874 = vmatpush1.bf16.msra.mxu0 %v734
        %875 = vmatprep.subr.bf16.mxu0 %v737
        %876 = vmatpush1.bf16.msra.mxu0 %v736
        %877 = vmatprep.mubr.bf16.mxu0 %v477
        %878 = vmatmul.mubr.bf16.gmra.mrb[0].mxu0 %v476
        %v879 = vpop.f32.mrb[0].mxu0
        %v880 = vadd.f32 %v837, %v879
        %v881 = vpop.f32.mrb[0].mxu0
        %v882 = vadd.f32 %v839, %v881
        %v883 = vpop.f32.mrb[0].mxu0
        %v884 = vadd.f32 %v841, %v883
        %v885 = vpop.f32.mrb[0].mxu0
        %v886 = vadd.f32 %v843, %v885
        %887 = vdwg.mxu0
        %v888 = vmax.f32 %v880, 0.0
        %v889 = vmax.f32 %v882, 0.0
        %v890 = vmax.f32 %v884, 0.0
        %v891 = vmax.f32 %v886, 0.0
        %v892 = vld [vmem:[#allocation7] sm:$0xff]
        %v893 = vld [vmem:[#allocation7 + $0x8] sm:$0xff]
        %v894 = vld [vmem:[#allocation7 + $0x10] sm:$0x1]
        %v895 = vld [vmem:[#allocation7 + $0x18] sm:$0x1]
        %v896 = vlaneseq
        %v897 = vand.u32 %v896, 127
        %v898 = vadd.s32 %v897, 128
        %v899 = vlaneseq
        %v900 = vshrl.u32 %v899, 7
        %v901 = vadd.s32 %v900, 8
        %vm902 = vcmp.lt.s32.totalorder %v900, 0
        %v903 = vsub.s32 0, %v900
        %v904 = vsel %vm902, %v903, %v900
        %v905 = vshrl.u32 %v904, 4
        %v906 = vand.u32 %v904, 15
        %v907 = vsub.s32 0, %v906
        %v908 = vsel %vm902, %v907, %v906
        %vm909 = vcmp.lt.s32.totalorder %v901, 0
        %v910 = vsub.s32 0, %v901
        %v911 = vsel %vm909, %v910, %v901
        %v912 = vshrl.u32 %v911, 4
        %v913 = vand.u32 %v911, 15
        %v914 = vsub.s32 0, %v913
        %v915 = vsel %vm909, %v914, %v913
        %vm916 = vcmp.ne.s32.totalorder %v908, 0
        %vm917 = vcmp.ne.s32.totalorder %v915, 0
        %vm918 = vcmp.lt.s32.totalorder %v908, 0
        %vm919 = vcmp.lt.s32.totalorder %v915, 0
        %vm920 = vmand %vm918, %vm916
        %vm921 = vmand %vm919, %vm917
        %v922 = vadd.s32 %v908, 16
        %v923 = vadd.s32 %v915, 16
        %v924 = vsel %vm920, %v922, %v908
        %v925 = vsel %vm921, %v923, %v915
        %vm926 = vcmp.ge.s32.totalorder %v897, 16
        %vm927 = vcmp.ge.s32.totalorder %v898, 16
        %928 = vrot.lane.b32.xlu0 %v888, 16
        %v929 = vpop.permute.xlu0 %928
        %930 = vrot.lane.b32.xlu0 %v890, 16
        %v931 = vpop.permute.xlu0 %930
        %932 = vrot.lane.b32.xlu0 %v889, 16
        %v933 = vpop.permute.xlu0 %932
        %934 = vrot.lane.b32.xlu0 %v891, 16
        %v935 = vpop.permute.xlu0 %934
        %vm936 = vcmp.lt.s32.totalorder %v897, 16
        %v937 = vsel %vm936, %v929, %v933
        %v938 = vsel %vm936, %v931, %v935
        %v939 = vsel %vm936, %v933, %v929
        %v940 = vsel %vm936, %v935, %v931
        %v941 = vsel %vm926, 1, 0
        %v942 = vsel %vm927, 1, 0
        %vm943 = vcmp.eq.s32.totalorder %v941, 1
        %vm944 = vcmp.eq.s32.totalorder %v942, 1
        %v945 = vsel %vm943, %v939, 0.0
        %v946 = vsel %vm944, %v937, 0.0
        %v947 = vsel %vm943, %v940, 0.0
        %v948 = vsel %vm944, %v938, 0.0
        %vm949 = vcmp.lt.s32.totalorder %v897, 240
        %vm950 = vcmp.lt.s32.totalorder %v898, 240
        %951 = vrot.lane.b32.xlu0 %v888, 112
        %v952 = vpop.permute.xlu0 %951
        %953 = vrot.lane.b32.xlu0 %v890, 112
        %v954 = vpop.permute.xlu0 %953
        %955 = vrot.lane.b32.xlu0 %v889, 112
        %v956 = vpop.permute.xlu0 %955
        %957 = vrot.lane.b32.xlu0 %v891, 112
        %v958 = vpop.permute.xlu0 %957
        %vm959 = vcmp.lt.s32.totalorder %v897, 112
        %v960 = vsel %vm959, %v952, %v956
        %v961 = vsel %vm959, %v954, %v958
        %v962 = vsel %vm959, %v956, %v952
        %v963 = vsel %vm959, %v958, %v954
        %v964 = vsel %vm949, 1, 0
        %v965 = vsel %vm950, 1, 0
        %vm966 = vcmp.eq.s32.totalorder %v964, 1
        %vm967 = vcmp.eq.s32.totalorder %v965, 1
        %v968 = vsel %vm966, %v960, 0.0
        %v969 = vsel %vm967, %v962, 0.0
        %v970 = vsel %vm966, %v961, 0.0
        %v971 = vsel %vm967, %v963, 0.0
        %v972 = vlaneseq
        %v973 = vshrl.u32 %v972, 7
        %v974 = vsub.s32 0, %v973
        %v975 = vrot.slane %v892, %v974
        %v976 = vlaneseq
        %v977 = vshrl.u32 %v976, 7
        %v978 = vsub.s32 0, %v977
        %v979 = vrot.slane %v893, %v978
        %v980 = vmul.f32 %v975, %v945
        %v981 = vmul.f32 %v979, %v946
        %v982 = vmul.f32 %v975, %v947
        %v983 = vmul.f32 %v979, %v948
        %v984 = vlaneseq
        %v985 = vshrl.u32 %v984, 7
        %v986 = vsub.s32 1, %v985
        %v987 = vrot.slane %v892, %v986
        %v988 = vlaneseq
        %v989 = vshrl.u32 %v988, 7
        %v990 = vsub.s32 1, %v989
        %v991 = vrot.slane %v893, %v990
        %v992 = vmul.f32 %v987, %v888
        %v993 = vmul.f32 %v991, %v889
        %v994 = vmul.f32 %v987, %v890
        %v995 = vmul.f32 %v991, %v891
        %v996 = vadd.f32 %v980, %v992
        %v997 = vadd.f32 %v981, %v993
        %v998 = vadd.f32 %v982, %v994
        %v999 = vadd.f32 %v983, %v995
        %v1000 = vlaneseq
        %v1001 = vshrl.u32 %v1000, 7
        %v1002 = vsub.s32 2, %v1001
        %v1003 = vrot.slane %v892, %v1002
        %v1004 = vlaneseq
        %v1005 = vshrl.u32 %v1004, 7
        %v1006 = vsub.s32 2, %v1005
        %v1007 = vrot.slane %v893, %v1006
        %v1008 = vmul.f32 %v1003, %v968
        %v1009 = vmul.f32 %v1007, %v969
        %v1010 = vmul.f32 %v1003, %v970
        %v1011 = vmul.f32 %v1007, %v971
        %v1012 = vadd.f32 %v996, %v1008
        %v1013 = vadd.f32 %v997, %v1009
        %v1014 = vadd.f32 %v998, %v1010
        %v1015 = vadd.f32 %v999, %v1011
        %v1016 = vlaneseq
        %v1017 = vshrl.u32 %v1016, 7
        %v1018 = vsub.s32 3, %v1017
        %v1019 = vrot.slane %v892, %v1018
        %v1020 = vlaneseq
        %v1021 = vshrl.u32 %v1020, 7
        %v1022 = vsub.s32 3, %v1021
        %v1023 = vrot.slane %v893, %v1022
        %v1024 = vmul.f32 %v1019, %v945
        %v1025 = vmul.f32 %v1023, %v946
        %v1026 = vmul.f32 %v1019, %v947
        %v1027 = vmul.f32 %v1023, %v948
        %v1028 = vlaneseq
        %v1029 = vshrl.u32 %v1028, 7
        %v1030 = vsub.s32 4, %v1029
        %v1031 = vrot.slane %v892, %v1030
        %v1032 = vlaneseq
        %v1033 = vshrl.u32 %v1032, 7
        %v1034 = vsub.s32 4, %v1033
        %v1035 = vrot.slane %v893, %v1034
        %v1036 = vmul.f32 %v1031, %v888
        %v1037 = vmul.f32 %v1035, %v889
        %v1038 = vmul.f32 %v1031, %v890
        %v1039 = vmul.f32 %v1035, %v891
        %v1040 = vadd.f32 %v1024, %v1036
        %v1041 = vadd.f32 %v1025, %v1037
        %v1042 = vadd.f32 %v1026, %v1038
        %v1043 = vadd.f32 %v1027, %v1039
        %v1044 = vlaneseq
        %v1045 = vshrl.u32 %v1044, 7
        %v1046 = vsub.s32 5, %v1045
        %v1047 = vrot.slane %v892, %v1046
        %v1048 = vlaneseq
        %v1049 = vshrl.u32 %v1048, 7
        %v1050 = vsub.s32 5, %v1049
        %v1051 = vrot.slane %v893, %v1050
        %v1052 = vmul.f32 %v1047, %v968
        %v1053 = vmul.f32 %v1051, %v969
        %v1054 = vmul.f32 %v1047, %v970
        %v1055 = vmul.f32 %v1051, %v971
        %v1056 = vadd.f32 %v1040, %v1052
        %v1057 = vadd.f32 %v1041, %v1053
        %v1058 = vadd.f32 %v1042, %v1054
        %v1059 = vadd.f32 %v1043, %v1055
        %v1060 = vlaneseq
        %v1061 = vshrl.u32 %v1060, 7
        %v1062 = vsub.s32 6, %v1061
        %v1063 = vrot.slane %v892, %v1062
        %v1064 = vlaneseq
        %v1065 = vshrl.u32 %v1064, 7
        %v1066 = vsub.s32 6, %v1065
        %v1067 = vrot.slane %v893, %v1066
        %v1068 = vmul.f32 %v1063, %v945
        %v1069 = vmul.f32 %v1067, %v946
        %v1070 = vmul.f32 %v1063, %v947
        %v1071 = vmul.f32 %v1067, %v948
        %v1072 = vlaneseq
        %v1073 = vshrl.u32 %v1072, 7
        %v1074 = vsub.s32 7, %v1073
        %v1075 = vrot.slane %v892, %v1074
        %v1076 = vlaneseq
        %v1077 = vshrl.u32 %v1076, 7
        %v1078 = vsub.s32 7, %v1077
        %v1079 = vrot.slane %v893, %v1078
        %v1080 = vmul.f32 %v1075, %v888
        %v1081 = vmul.f32 %v1079, %v889
        %v1082 = vmul.f32 %v1075, %v890
        %v1083 = vmul.f32 %v1079, %v891
        %v1084 = vadd.f32 %v1068, %v1080
        %v1085 = vadd.f32 %v1069, %v1081
        %v1086 = vadd.f32 %v1070, %v1082
        %v1087 = vadd.f32 %v1071, %v1083
        %v1088 = vlaneseq
        %v1089 = vshrl.u32 %v1088, 7
        %v1090 = vsub.s32 0, %v1089
        %v1091 = vrot.slane %v894, %v1090
        %v1092 = vlaneseq
        %v1093 = vshrl.u32 %v1092, 7
        %v1094 = vsub.s32 0, %v1093
        %v1095 = vrot.slane %v895, %v1094
        %v1096 = vmul.f32 %v1091, %v968
        %v1097 = vmul.f32 %v1095, %v969
        %v1098 = vmul.f32 %v1091, %v970
        %v1099 = vmul.f32 %v1095, %v971
        %v1100 = vadd.f32 %v1084, %v1096
        %v1101 = vadd.f32 %v1085, %v1097
        %v1102 = vadd.f32 %v1086, %v1098
        %v1103 = vadd.f32 %v1087, %v1099
        %vm1104 = vcmp.gt.s32.totalorder %v924, 0
        %vm1105 = vcmp.gt.s32.totalorder %v925, 0
        %v1106 = vrot.slane %v1012, 7
        %v1107 = vrot.slane %v1013, 7
        %v1108 = vrot.slane %v1014, 7
        %v1109 = vrot.slane %v1015, 7
        %vm1110 = vcmp.lt.s32.totalorder %v900, 1
        %v1111 = vsel %vm1110, %v1106, %v1108
        %v1112 = vsel %vm1110, %v1107, %v1109
        %v1113 = vsel %vm1110, %v1108, %v1106
        %v1114 = vsel %vm1110, %v1109, %v1107
        %v1115 = vsel %vm1104, 1, 0
        %v1116 = vsel %vm1105, 1, 0
        %vm1117 = vcmp.eq.s32.totalorder %v1115, 1
        %vm1118 = vcmp.eq.s32.totalorder %v1116, 1
        %v1119 = vsel %vm1117, %v1113, 0.0
        %v1120 = vsel %vm1117, %v1114, 0.0
        %v1121 = vsel %vm1118, %v1111, 0.0
        %v1122 = vsel %vm1118, %v1112, 0.0
        %vm1123 = vcmp.lt.s32.totalorder %v924, 15
        %vm1124 = vcmp.lt.s32.totalorder %v925, 15
        %v1125 = vrot.slane %v1100, 1
        %v1126 = vrot.slane %v1101, 1
        %v1127 = vrot.slane %v1102, 1
        %v1128 = vrot.slane %v1103, 1
        %vm1129 = vcmp.lt.s32.totalorder %v900, 7
        %v1130 = vsel %vm1129, %v1125, %v1127
        %v1131 = vsel %vm1129, %v1126, %v1128
        %v1132 = vsel %vm1129, %v1127, %v1125
        %v1133 = vsel %vm1129, %v1128, %v1126
        %v1134 = vsel %vm1123, 1, 0
        %v1135 = vsel %vm1124, 1, 0
        %vm1136 = vcmp.eq.s32.totalorder %v1134, 1
        %vm1137 = vcmp.eq.s32.totalorder %v1135, 1
        %v1138 = vsel %vm1136, %v1130, 0.0
        %v1139 = vsel %vm1136, %v1131, 0.0
        %v1140 = vsel %vm1137, %v1132, 0.0
        %v1141 = vsel %vm1137, %v1133, 0.0
        %v1142 = vld [vmem:[%s4] sm:$0x3]
        %v1144 = vlaneseq
        %v1145 = vshrl.u32 %v1144, 7
        %v1146 = vsub.s32 0, %v1145
        %v1147 = vrot.slane %v1142, %v1146
        %v1148 = vlaneseq
        %v1149 = vshrl.u32 %v1148, 7
        %v1150 = vsub.s32 1, %v1149
        %v1151 = vrot.slane %v1142, %v1150
        %v1154 = vadd.f32 %v1056, %v1147
        %v1155 = vadd.f32 %v1057, %v1151
        %v1156 = vadd.f32 %v1058, %v1147
        %v1157 = vadd.f32 %v1059, %v1151
        %v1158 = vadd.f32 %v1154, %v1119
        %v1159 = vadd.f32 %v1155, %v1120
        %v1160 = vadd.f32 %v1156, %v1121
        %v1161 = vadd.f32 %v1157, %v1122
        %v1162 = vadd.f32 %v1158, %v1138
        %v1163 = vadd.f32 %v1159, %v1139
        %v1164 = vadd.f32 %v1160, %v1140
        %v1165 = vadd.f32 %v1161, %v1141
        %v1166 = vpack.c.bf16 %v1164, %v1162
        %v1167 = vpack.c.bf16 %v1165, %v1163
        %v1168 = vld [vmem:[#allocation8] sm:$0xff]
        %v1169 = vld [vmem:[#allocation8 + $0x8] sm:$0xff]
        %v1170 = vld [vmem:[#allocation8 + $0x10] sm:$0xff]
        %v1171 = vld [vmem:[#allocation8 + $0x18] sm:$0xff]
        %v1172 = vld [vmem:[#allocation8 + $0x20] sm:$0xff]
        %v1173 = vld [vmem:[#allocation8 + $0x28] sm:$0xff]
        %v1174 = vld [vmem:[#allocation8 + $0x30] sm:$0xff]
        %v1175 = vld [vmem:[#allocation8 + $0x38] sm:$0xff]
        %v1176 = vld [vmem:[#allocation8 + $0x40] sm:$0xff]
        %v1177 = vld [vmem:[#allocation8 + $0x48] sm:$0xff]
        %v1178 = vld [vmem:[#allocation8 + $0x50] sm:$0xff]
        %v1179 = vld [vmem:[#allocation8 + $0x58] sm:$0xff]
        %v1180 = vld [vmem:[#allocation8 + $0x60] sm:$0xff]
        %v1181 = vld [vmem:[#allocation8 + $0x68] sm:$0xff]
        %v1182 = vld [vmem:[#allocation8 + $0x70] sm:$0xff]
        %v1183 = vld [vmem:[#allocation8 + $0x78] sm:$0xff]
        %v1184 = vld [vmem:[#allocation8 + $0x80] sm:$0xff]
        %v1185 = vld [vmem:[#allocation8 + $0x88] sm:$0xff]
        %v1186 = vld [vmem:[#allocation8 + $0x90] sm:$0xff]
        %v1187 = vld [vmem:[#allocation8 + $0x98] sm:$0xff]
        %v1188 = vld [vmem:[#allocation8 + $0xa0] sm:$0xff]
        %v1189 = vld [vmem:[#allocation8 + $0xa8] sm:$0xff]
        %v1190 = vld [vmem:[#allocation8 + $0xb0] sm:$0xff]
        %v1191 = vld [vmem:[#allocation8 + $0xb8] sm:$0xff]
        %v1192 = vld [vmem:[#allocation8 + $0xc0] sm:$0xff]
        %v1193 = vld [vmem:[#allocation8 + $0xc8] sm:$0xff]
        %v1194 = vld [vmem:[#allocation8 + $0xd0] sm:$0xff]
        %v1195 = vld [vmem:[#allocation8 + $0xd8] sm:$0xff]
        %v1196 = vld [vmem:[#allocation8 + $0xe0] sm:$0xff]
        %v1197 = vld [vmem:[#allocation8 + $0xe8] sm:$0xff]
        %v1198 = vld [vmem:[#allocation8 + $0xf0] sm:$0xff]
        %v1199 = vld [vmem:[#allocation8 + $0xf8] sm:$0xff]
        %v1200 = vld [vmem:[#allocation8 + $0x100] sm:$0xff]
        %v1201 = vld [vmem:[#allocation8 + $0x108] sm:$0xff]
        %v1202 = vld [vmem:[#allocation8 + $0x110] sm:$0xff]
        %v1203 = vld [vmem:[#allocation8 + $0x118] sm:$0xff]
        %v1204 = vld [vmem:[#allocation8 + $0x120] sm:$0xff]
        %v1205 = vld [vmem:[#allocation8 + $0x128] sm:$0xff]
        %v1206 = vld [vmem:[#allocation8 + $0x130] sm:$0xff]
        %v1207 = vld [vmem:[#allocation8 + $0x138] sm:$0xff]
        %v1208 = vld [vmem:[#allocation8 + $0x140] sm:$0xff]
        %v1209 = vld [vmem:[#allocation8 + $0x148] sm:$0xff]
        %v1210 = vld [vmem:[#allocation8 + $0x150] sm:$0xff]
        %v1211 = vld [vmem:[#allocation8 + $0x158] sm:$0xff]
        %v1212 = vld [vmem:[#allocation8 + $0x160] sm:$0xff]
        %v1213 = vld [vmem:[#allocation8 + $0x168] sm:$0xff]
        %v1214 = vld [vmem:[#allocation8 + $0x170] sm:$0xff]
        %v1215 = vld [vmem:[#allocation8 + $0x178] sm:$0xff]
        %v1216 = vld [vmem:[#allocation8 + $0x180] sm:$0xff]
        %v1217 = vld [vmem:[#allocation8 + $0x188] sm:$0xff]
        %v1218 = vld [vmem:[#allocation8 + $0x190] sm:$0xff]
        %v1219 = vld [vmem:[#allocation8 + $0x198] sm:$0xff]
        %v1220 = vld [vmem:[#allocation8 + $0x1a0] sm:$0xff]
        %v1221 = vld [vmem:[#allocation8 + $0x1a8] sm:$0xff]
        %v1222 = vld [vmem:[#allocation8 + $0x1b0] sm:$0xff]
        %v1223 = vld [vmem:[#allocation8 + $0x1b8] sm:$0xff]
        %v1224 = vld [vmem:[#allocation8 + $0x1c0] sm:$0xff]
        %v1225 = vld [vmem:[#allocation8 + $0x1c8] sm:$0xff]
        %v1226 = vld [vmem:[#allocation8 + $0x1d0] sm:$0xff]
        %v1227 = vld [vmem:[#allocation8 + $0x1d8] sm:$0xff]
        %v1228 = vld [vmem:[#allocation8 + $0x1e0] sm:$0xff]
        %v1229 = vld [vmem:[#allocation8 + $0x1e8] sm:$0xff]
        %v1230 = vld [vmem:[#allocation8 + $0x1f0] sm:$0xff]
        %v1231 = vld [vmem:[#allocation8 + $0x1f8] sm:$0xff]
        %v1232 = vld [vmem:[%s6] sm:$0xf]
        %v1234 = vlaneseq
        %v1235 = vshrl.u32 %v1234, 7
        %v1236 = vsub.s32 0, %v1235
        %v1237 = vrot.slane %v1232, %v1236
        %v1238 = vlaneseq
        %v1239 = vshrl.u32 %v1238, 7
        %v1240 = vsub.s32 1, %v1239
        %v1241 = vrot.slane %v1232, %v1240
        %v1242 = vlaneseq
        %v1243 = vshrl.u32 %v1242, 7
        %v1244 = vsub.s32 2, %v1243
        %v1245 = vrot.slane %v1232, %v1244
        %v1246 = vlaneseq
        %v1247 = vshrl.u32 %v1246, 7
        %v1248 = vsub.s32 3, %v1247
        %v1249 = vrot.slane %v1232, %v1248
        %v1318 = vunpack.c.l.b16 %v1168
        %v1319 = vunpack.c.h.b16 %v1168
        %v1320 = vunpack.c.l.b16 %v1169
        %v1321 = vunpack.c.h.b16 %v1169
        %v1322 = vunpack.c.l.b16 %v1170
        %v1323 = vunpack.c.h.b16 %v1170
        %v1324 = vunpack.c.l.b16 %v1171
        %v1325 = vunpack.c.h.b16 %v1171
        %v1326 = vunpack.c.l.b16 %v1172
        %v1327 = vunpack.c.h.b16 %v1172
        %v1328 = vunpack.c.l.b16 %v1173
        %v1329 = vunpack.c.h.b16 %v1173
        %v1330 = vunpack.c.l.b16 %v1174
        %v1331 = vunpack.c.h.b16 %v1174
        %v1332 = vunpack.c.l.b16 %v1175
        %v1333 = vunpack.c.h.b16 %v1175
        %v1334 = vunpack.c.l.b16 %v1176
        %v1335 = vunpack.c.h.b16 %v1176
        %v1336 = vunpack.c.l.b16 %v1177
        %v1337 = vunpack.c.h.b16 %v1177
        %v1338 = vunpack.c.l.b16 %v1178
        %v1339 = vunpack.c.h.b16 %v1178
        %v1340 = vunpack.c.l.b16 %v1179
        %v1341 = vunpack.c.h.b16 %v1179
        %v1342 = vunpack.c.l.b16 %v1180
        %v1343 = vunpack.c.h.b16 %v1180
        %v1344 = vunpack.c.l.b16 %v1181
        %v1345 = vunpack.c.h.b16 %v1181
        %v1346 = vunpack.c.l.b16 %v1182
        %v1347 = vunpack.c.h.b16 %v1182
        %v1348 = vunpack.c.l.b16 %v1183
        %v1349 = vunpack.c.h.b16 %v1183
        %v1350 = vunpack.c.l.b16 %v1184
        %v1351 = vunpack.c.h.b16 %v1184
        %v1352 = vunpack.c.l.b16 %v1185
        %v1353 = vunpack.c.h.b16 %v1185
        %v1354 = vunpack.c.l.b16 %v1186
        %v1355 = vunpack.c.h.b16 %v1186
        %v1356 = vunpack.c.l.b16 %v1187
        %v1357 = vunpack.c.h.b16 %v1187
        %v1358 = vunpack.c.l.b16 %v1188
        %v1359 = vunpack.c.h.b16 %v1188
        %v1360 = vunpack.c.l.b16 %v1189
        %v1361 = vunpack.c.h.b16 %v1189
        %v1362 = vunpack.c.l.b16 %v1190
        %v1363 = vunpack.c.h.b16 %v1190
        %v1364 = vunpack.c.l.b16 %v1191
        %v1365 = vunpack.c.h.b16 %v1191
        %v1366 = vunpack.c.l.b16 %v1192
        %v1367 = vunpack.c.h.b16 %v1192
        %v1368 = vunpack.c.l.b16 %v1193
        %v1369 = vunpack.c.h.b16 %v1193
        %v1370 = vunpack.c.l.b16 %v1194
        %v1371 = vunpack.c.h.b16 %v1194
        %v1372 = vunpack.c.l.b16 %v1195
        %v1373 = vunpack.c.h.b16 %v1195
        %v1374 = vunpack.c.l.b16 %v1196
        %v1375 = vunpack.c.h.b16 %v1196
        %v1376 = vunpack.c.l.b16 %v1197
        %v1377 = vunpack.c.h.b16 %v1197
        %v1378 = vunpack.c.l.b16 %v1198
        %v1379 = vunpack.c.h.b16 %v1198
        %v1380 = vunpack.c.l.b16 %v1199
        %v1381 = vunpack.c.h.b16 %v1199
        %v1382 = vunpack.c.l.b16 %v1200
        %v1383 = vunpack.c.h.b16 %v1200
        %v1384 = vunpack.c.l.b16 %v1201
        %v1385 = vunpack.c.h.b16 %v1201
        %v1386 = vunpack.c.l.b16 %v1202
        %v1387 = vunpack.c.h.b16 %v1202
        %v1388 = vunpack.c.l.b16 %v1203
        %v1389 = vunpack.c.h.b16 %v1203
        %v1390 = vunpack.c.l.b16 %v1204
        %v1391 = vunpack.c.h.b16 %v1204
        %v1392 = vunpack.c.l.b16 %v1205
        %v1393 = vunpack.c.h.b16 %v1205
        %v1394 = vunpack.c.l.b16 %v1206
        %v1395 = vunpack.c.h.b16 %v1206
        %v1396 = vunpack.c.l.b16 %v1207
        %v1397 = vunpack.c.h.b16 %v1207
        %v1398 = vunpack.c.l.b16 %v1208
        %v1399 = vunpack.c.h.b16 %v1208
        %v1400 = vunpack.c.l.b16 %v1209
        %v1401 = vunpack.c.h.b16 %v1209
        %v1402 = vunpack.c.l.b16 %v1210
        %v1403 = vunpack.c.h.b16 %v1210
        %v1404 = vunpack.c.l.b16 %v1211
        %v1405 = vunpack.c.h.b16 %v1211
        %v1406 = vunpack.c.l.b16 %v1212
        %v1407 = vunpack.c.h.b16 %v1212
        %v1408 = vunpack.c.l.b16 %v1213
        %v1409 = vunpack.c.h.b16 %v1213
        %v1410 = vunpack.c.l.b16 %v1214
        %v1411 = vunpack.c.h.b16 %v1214
        %v1412 = vunpack.c.l.b16 %v1215
        %v1413 = vunpack.c.h.b16 %v1215
        %v1414 = vunpack.c.l.b16 %v1216
        %v1415 = vunpack.c.h.b16 %v1216
        %v1416 = vunpack.c.l.b16 %v1217
        %v1417 = vunpack.c.h.b16 %v1217
        %v1418 = vunpack.c.l.b16 %v1218
        %v1419 = vunpack.c.h.b16 %v1218
        %v1420 = vunpack.c.l.b16 %v1219
        %v1421 = vunpack.c.h.b16 %v1219
        %v1422 = vunpack.c.l.b16 %v1220
        %v1423 = vunpack.c.h.b16 %v1220
        %v1424 = vunpack.c.l.b16 %v1221
        %v1425 = vunpack.c.h.b16 %v1221
        %v1426 = vunpack.c.l.b16 %v1222
        %v1427 = vunpack.c.h.b16 %v1222
        %v1428 = vunpack.c.l.b16 %v1223
        %v1429 = vunpack.c.h.b16 %v1223
        %v1430 = vunpack.c.l.b16 %v1224
        %v1431 = vunpack.c.h.b16 %v1224
        %v1432 = vunpack.c.l.b16 %v1225
        %v1433 = vunpack.c.h.b16 %v1225
        %v1434 = vunpack.c.l.b16 %v1226
        %v1435 = vunpack.c.h.b16 %v1226
        %v1436 = vunpack.c.l.b16 %v1227
        %v1437 = vunpack.c.h.b16 %v1227
        %v1438 = vunpack.c.l.b16 %v1228
        %v1439 = vunpack.c.h.b16 %v1228
        %v1440 = vunpack.c.l.b16 %v1229
        %v1441 = vunpack.c.h.b16 %v1229
        %v1442 = vunpack.c.l.b16 %v1230
        %v1443 = vunpack.c.h.b16 %v1230
        %v1444 = vunpack.c.l.b16 %v1231
        %v1445 = vunpack.c.h.b16 %v1231
        %v1446 = vpack.c.b16 %v1322, %v1318
        %v1447 = vpack.c.b16 %v1323, %v1319
        %v1448 = vpack.c.b16 %v1324, %v1320
        %v1449 = vpack.c.b16 %v1325, %v1321
        %v1450 = vpack.c.b16 %v1330, %v1326
        %v1451 = vpack.c.b16 %v1331, %v1327
        %v1452 = vpack.c.b16 %v1332, %v1328
        %v1453 = vpack.c.b16 %v1333, %v1329
        %v1454 = vpack.c.b16 %v1338, %v1334
        %v1455 = vpack.c.b16 %v1339, %v1335
        %v1456 = vpack.c.b16 %v1340, %v1336
        %v1457 = vpack.c.b16 %v1341, %v1337
        %v1458 = vpack.c.b16 %v1346, %v1342
        %v1459 = vpack.c.b16 %v1347, %v1343
        %v1460 = vpack.c.b16 %v1348, %v1344
        %v1461 = vpack.c.b16 %v1349, %v1345
        %v1462 = vpack.c.b16 %v1354, %v1350
        %v1463 = vpack.c.b16 %v1355, %v1351
        %v1464 = vpack.c.b16 %v1356, %v1352
        %v1465 = vpack.c.b16 %v1357, %v1353
        %v1466 = vpack.c.b16 %v1362, %v1358
        %v1467 = vpack.c.b16 %v1363, %v1359
        %v1468 = vpack.c.b16 %v1364, %v1360
        %v1469 = vpack.c.b16 %v1365, %v1361
        %v1470 = vpack.c.b16 %v1370, %v1366
        %v1471 = vpack.c.b16 %v1371, %v1367
        %v1472 = vpack.c.b16 %v1372, %v1368
        %v1473 = vpack.c.b16 %v1373, %v1369
        %v1474 = vpack.c.b16 %v1378, %v1374
        %v1475 = vpack.c.b16 %v1379, %v1375
        %v1476 = vpack.c.b16 %v1380, %v1376
        %v1477 = vpack.c.b16 %v1381, %v1377
        %v1478 = vpack.c.b16 %v1386, %v1382
        %v1479 = vpack.c.b16 %v1387, %v1383
        %v1480 = vpack.c.b16 %v1388, %v1384
        %v1481 = vpack.c.b16 %v1389, %v1385
        %v1482 = vpack.c.b16 %v1394, %v1390
        %v1483 = vpack.c.b16 %v1395, %v1391
        %v1484 = vpack.c.b16 %v1396, %v1392
        %v1485 = vpack.c.b16 %v1397, %v1393
        %v1486 = vpack.c.b16 %v1402, %v1398
        %v1487 = vpack.c.b16 %v1403, %v1399
        %v1488 = vpack.c.b16 %v1404, %v1400
        %v1489 = vpack.c.b16 %v1405, %v1401
        %v1490 = vpack.c.b16 %v1410, %v1406
        %v1491 = vpack.c.b16 %v1411, %v1407
        %v1492 = vpack.c.b16 %v1412, %v1408
        %v1493 = vpack.c.b16 %v1413, %v1409
        %v1494 = vpack.c.b16 %v1418, %v1414
        %v1495 = vpack.c.b16 %v1419, %v1415
        %v1496 = vpack.c.b16 %v1420, %v1416
        %v1497 = vpack.c.b16 %v1421, %v1417
        %v1498 = vpack.c.b16 %v1426, %v1422
        %v1499 = vpack.c.b16 %v1427, %v1423
        %v1500 = vpack.c.b16 %v1428, %v1424
        %v1501 = vpack.c.b16 %v1429, %v1425
        %v1502 = vpack.c.b16 %v1434, %v1430
        %v1503 = vpack.c.b16 %v1435, %v1431
        %v1504 = vpack.c.b16 %v1436, %v1432
        %v1505 = vpack.c.b16 %v1437, %v1433
        %v1506 = vpack.c.b16 %v1442, %v1438
        %v1507 = vpack.c.b16 %v1443, %v1439
        %v1508 = vpack.c.b16 %v1444, %v1440
        %v1509 = vpack.c.b16 %v1445, %v1441
        %1574 = vmatprep.subr.bf16.mxu0 %v1447
        %1575 = vmatpush1.bf16.msra.mxu0 %v1446
        %1576 = vmatprep.subr.bf16.mxu0 %v1451
        %1577 = vmatpush1.bf16.msra.mxu0 %v1450
        %1578 = vmatprep.subr.bf16.mxu0 %v1455
        %1579 = vmatpush1.bf16.msra.mxu0 %v1454
        %1580 = vmatprep.subr.bf16.mxu0 %v1459
        %1581 = vmatpush1.bf16.msra.mxu0 %v1458
        %1582 = vmatprep.subr.bf16.mxu0 %v1463
        %1583 = vmatpush1.bf16.msra.mxu0 %v1462
        %1584 = vmatprep.subr.bf16.mxu0 %v1467
        %1585 = vmatpush1.bf16.msra.mxu0 %v1466
        %1586 = vmatprep.subr.bf16.mxu0 %v1471
        %1587 = vmatpush1.bf16.msra.mxu0 %v1470
        %1588 = vmatprep.subr.bf16.mxu0 %v1475
        %1589 = vmatpush1.bf16.msra.mxu0 %v1474
        %1590 = vmatprep.subr.bf16.mxu0 %v1479
        %1591 = vmatpush1.bf16.msra.mxu0 %v1478
        %1592 = vmatprep.subr.bf16.mxu0 %v1483
        %1593 = vmatpush1.bf16.msra.mxu0 %v1482
        %1594 = vmatprep.subr.bf16.mxu0 %v1487
        %1595 = vmatpush1.bf16.msra.mxu0 %v1486
        %1596 = vmatprep.subr.bf16.mxu0 %v1491
        %1597 = vmatpush1.bf16.msra.mxu0 %v1490
        %1598 = vmatprep.subr.bf16.mxu0 %v1495
        %1599 = vmatpush1.bf16.msra.mxu0 %v1494
        %1600 = vmatprep.subr.bf16.mxu0 %v1499
        %1601 = vmatpush1.bf16.msra.mxu0 %v1498
        %1602 = vmatprep.subr.bf16.mxu0 %v1503
        %1603 = vmatpush1.bf16.msra.mxu0 %v1502
        %1604 = vmatprep.subr.bf16.mxu0 %v1507
        %1605 = vmatpush1.bf16.msra.mxu0 %v1506
        %1606 = vmatprep.mubr.bf16.mxu0 %v1167
        %1607 = vmatmul.mubr.bf16.gmra.mrb[0].mxu0 %v1166
        %v1608 = vpop.f32.mrb[0].mxu0
        %v1609 = vadd.f32 %v1237, %v1608
        %v1610 = vpop.f32.mrb[0].mxu0
        %v1611 = vadd.f32 %v1241, %v1610
        %v1612 = vpop.f32.mrb[0].mxu0
        %v1613 = vadd.f32 %v1237, %v1612
        %v1614 = vpop.f32.mrb[0].mxu0
        %v1615 = vadd.f32 %v1241, %v1614
        %1616 = vdwg.mxu0
        %1617 = vmatprep.subr.bf16.mxu0 %v1449
        %1618 = vmatpush1.bf16.msra.mxu0 %v1448
        %1619 = vmatprep.subr.bf16.mxu0 %v1453
        %1620 = vmatpush1.bf16.msra.mxu0 %v1452
        %1621 = vmatprep.subr.bf16.mxu0 %v1457
        %1622 = vmatpush1.bf16.msra.mxu0 %v1456
        %1623 = vmatprep.subr.bf16.mxu0 %v1461
        %1624 = vmatpush1.bf16.msra.mxu0 %v1460
        %1625 = vmatprep.subr.bf16.mxu0 %v1465
        %1626 = vmatpush1.bf16.msra.mxu0 %v1464
        %1627 = vmatprep.subr.bf16.mxu0 %v1469
        %1628 = vmatpush1.bf16.msra.mxu0 %v1468
        %1629 = vmatprep.subr.bf16.mxu0 %v1473
        %1630 = vmatpush1.bf16.msra.mxu0 %v1472
        %1631 = vmatprep.subr.bf16.mxu0 %v1477
        %1632 = vmatpush1.bf16.msra.mxu0 %v1476
        %1633 = vmatprep.subr.bf16.mxu0 %v1481
        %1634 = vmatpush1.bf16.msra.mxu0 %v1480
        %1635 = vmatprep.subr.bf16.mxu0 %v1485
        %1636 = vmatpush1.bf16.msra.mxu0 %v1484
        %1637 = vmatprep.subr.bf16.mxu0 %v1489
        %1638 = vmatpush1.bf16.msra.mxu0 %v1488
        %1639 = vmatprep.subr.bf16.mxu0 %v1493
        %1640 = vmatpush1.bf16.msra.mxu0 %v1492
        %1641 = vmatprep.subr.bf16.mxu0 %v1497
        %1642 = vmatpush1.bf16.msra.mxu0 %v1496
        %1643 = vmatprep.subr.bf16.mxu0 %v1501
        %1644 = vmatpush1.bf16.msra.mxu0 %v1500
        %1645 = vmatprep.subr.bf16.mxu0 %v1505
        %1646 = vmatpush1.bf16.msra.mxu0 %v1504
        %1647 = vmatprep.subr.bf16.mxu0 %v1509
        %1648 = vmatpush1.bf16.msra.mxu0 %v1508
        %1649 = vmatprep.mubr.bf16.mxu0 %v1167
        %1650 = vmatmul.mubr.bf16.gmra.mrb[0].mxu0 %v1166
        %v1651 = vpop.f32.mrb[0].mxu0
        %v1652 = vadd.f32 %v1245, %v1651
        %v1653 = vpop.f32.mrb[0].mxu0
        %v1654 = vadd.f32 %v1249, %v1653
        %v1655 = vpop.f32.mrb[0].mxu0
        %v1656 = vadd.f32 %v1245, %v1655
        %v1657 = vpop.f32.mrb[0].mxu0
        %v1658 = vadd.f32 %v1249, %v1657
        %1659 = vdwg.mxu0
        %v1660 = vmax.f32 %v1609, 0.0
        %v1661 = vmax.f32 %v1611, 0.0
        %v1662 = vmax.f32 %v1652, 0.0
        %v1663 = vmax.f32 %v1654, 0.0
        %v1664 = vmax.f32 %v1613, 0.0
        %v1665 = vmax.f32 %v1615, 0.0
        %v1666 = vmax.f32 %v1656, 0.0
        %v1667 = vmax.f32 %v1658, 0.0
        %v1668 = vld [vmem:[#allocation10] sm:$0xff]
        %v1669 = vld [vmem:[#allocation10 + $0x8] sm:$0xff]
        %v1670 = vld [vmem:[#allocation10 + $0x10] sm:$0xff]
        %v1671 = vld [vmem:[#allocation10 + $0x18] sm:$0xff]
        %v1672 = vld [vmem:[#allocation10 + $0x20] sm:$0xff]
        %v1673 = vld [vmem:[#allocation10 + $0x28] sm:$0xff]
        %v1674 = vld [vmem:[#allocation10 + $0x30] sm:$0xff]
        %v1675 = vld [vmem:[#allocation10 + $0x38] sm:$0xff]
        %v1676 = vld [vmem:[#allocation10 + $0x40] sm:$0xff]
        %v1677 = vld [vmem:[#allocation10 + $0x48] sm:$0xff]
        %v1678 = vld [vmem:[#allocation10 + $0x50] sm:$0xff]
        %v1679 = vld [vmem:[#allocation10 + $0x58] sm:$0xff]
        %v1680 = vld [vmem:[#allocation10 + $0x60] sm:$0xff]
        %v1681 = vld [vmem:[#allocation10 + $0x68] sm:$0xff]
        %v1682 = vld [vmem:[#allocation10 + $0x70] sm:$0xff]
        %v1683 = vld [vmem:[#allocation10 + $0x78] sm:$0xff]
        %v1684 = vld [vmem:[#allocation10 + $0x80] sm:$0xff]
        %v1685 = vld [vmem:[#allocation10 + $0x88] sm:$0xff]
        %v1686 = vld [vmem:[#allocation10 + $0x90] sm:$0xff]
        %v1687 = vld [vmem:[#allocation10 + $0x98] sm:$0xff]
        %v1688 = vld [vmem:[#allocation10 + $0xa0] sm:$0xff]
        %v1689 = vld [vmem:[#allocation10 + $0xa8] sm:$0xff]
        %v1690 = vld [vmem:[#allocation10 + $0xb0] sm:$0xff]
        %v1691 = vld [vmem:[#allocation10 + $0xb8] sm:$0xff]
        %v1692 = vld [vmem:[#allocation10 + $0xc0] sm:$0xff]
        %v1693 = vld [vmem:[#allocation10 + $0xc8] sm:$0xff]
        %v1694 = vld [vmem:[#allocation10 + $0xd0] sm:$0xff]
        %v1695 = vld [vmem:[#allocation10 + $0xd8] sm:$0xff]
        %v1696 = vld [vmem:[#allocation10 + $0xe0] sm:$0xff]
        %v1697 = vld [vmem:[#allocation10 + $0xe8] sm:$0xff]
        %v1698 = vld [vmem:[#allocation10 + $0xf0] sm:$0xff]
        %v1699 = vld [vmem:[#allocation10 + $0xf8] sm:$0xff]
        %v1700 = vld [vmem:[#allocation10 + $0x100] sm:$0xff]
        %v1701 = vld [vmem:[#allocation10 + $0x108] sm:$0xff]
        %v1702 = vld [vmem:[#allocation10 + $0x110] sm:$0xff]
        %v1703 = vld [vmem:[#allocation10 + $0x118] sm:$0xff]
        %v1704 = vld [vmem:[#allocation10 + $0x120] sm:$0xff]
        %v1705 = vld [vmem:[#allocation10 + $0x128] sm:$0xff]
        %v1706 = vld [vmem:[#allocation10 + $0x130] sm:$0xff]
        %v1707 = vld [vmem:[#allocation10 + $0x138] sm:$0xff]
        %v1708 = vld [vmem:[#allocation10 + $0x140] sm:$0xff]
        %v1709 = vld [vmem:[#allocation10 + $0x148] sm:$0xff]
        %v1710 = vld [vmem:[#allocation10 + $0x150] sm:$0xff]
        %v1711 = vld [vmem:[#allocation10 + $0x158] sm:$0xff]
        %v1712 = vld [vmem:[#allocation10 + $0x160] sm:$0xff]
        %v1713 = vld [vmem:[#allocation10 + $0x168] sm:$0xff]
        %v1714 = vld [vmem:[#allocation10 + $0x170] sm:$0xff]
        %v1715 = vld [vmem:[#allocation10 + $0x178] sm:$0xff]
        %v1716 = vld [vmem:[#allocation10 + $0x180] sm:$0xff]
        %v1717 = vld [vmem:[#allocation10 + $0x188] sm:$0xff]
        %v1718 = vld [vmem:[#allocation10 + $0x190] sm:$0xff]
        %v1719 = vld [vmem:[#allocation10 + $0x198] sm:$0xff]
        %v1720 = vld [vmem:[#allocation10 + $0x1a0] sm:$0xff]
        %v1721 = vld [vmem:[#allocation10 + $0x1a8] sm:$0xff]
        %v1722 = vld [vmem:[#allocation10 + $0x1b0] sm:$0xff]
        %v1723 = vld [vmem:[#allocation10 + $0x1b8] sm:$0xff]
        %v1724 = vld [vmem:[#allocation10 + $0x1c0] sm:$0xff]
        %v1725 = vld [vmem:[#allocation10 + $0x1c8] sm:$0xff]
        %v1726 = vld [vmem:[#allocation10 + $0x1d0] sm:$0xff]
        %v1727 = vld [vmem:[#allocation10 + $0x1d8] sm:$0xff]
        %v1728 = vld [vmem:[#allocation10 + $0x1e0] sm:$0xff]
        %v1729 = vld [vmem:[#allocation10 + $0x1e8] sm:$0xff]
        %v1730 = vld [vmem:[#allocation10 + $0x1f0] sm:$0xff]
        %v1731 = vld [vmem:[#allocation10 + $0x1f8] sm:$0xff]
        %v1732 = vld [vmem:[#allocation10 + $0x200] sm:$0xff]
        %v1733 = vld [vmem:[#allocation10 + $0x208] sm:$0xff]
        %v1734 = vld [vmem:[#allocation10 + $0x210] sm:$0xff]
        %v1735 = vld [vmem:[#allocation10 + $0x218] sm:$0xff]
        %v1736 = vld [vmem:[#allocation10 + $0x220] sm:$0xff]
        %v1737 = vld [vmem:[#allocation10 + $0x228] sm:$0xff]
        %v1738 = vld [vmem:[#allocation10 + $0x230] sm:$0xff]
        %v1739 = vld [vmem:[#allocation10 + $0x238] sm:$0xff]
        %v1740 = vld [vmem:[#allocation10 + $0x240] sm:$0xff]
        %v1741 = vld [vmem:[#allocation10 + $0x248] sm:$0xff]
        %v1742 = vld [vmem:[#allocation10 + $0x250] sm:$0xff]
        %v1743 = vld [vmem:[#allocation10 + $0x258] sm:$0xff]
        %v1744 = vld [vmem:[#allocation10 + $0x260] sm:$0xff]
        %v1745 = vld [vmem:[#allocation10 + $0x268] sm:$0xff]
        %v1746 = vld [vmem:[#allocation10 + $0x270] sm:$0xff]
        %v1747 = vld [vmem:[#allocation10 + $0x278] sm:$0xff]
        %v1748 = vld [vmem:[#allocation10 + $0x280] sm:$0xff]
        %v1749 = vld [vmem:[#allocation10 + $0x288] sm:$0xff]
        %v1750 = vld [vmem:[#allocation10 + $0x290] sm:$0xff]
        %v1751 = vld [vmem:[#allocation10 + $0x298] sm:$0xff]
        %v1752 = vld [vmem:[#allocation10 + $0x2a0] sm:$0xff]
        %v1753 = vld [vmem:[#allocation10 + $0x2a8] sm:$0xff]
        %v1754 = vld [vmem:[#allocation10 + $0x2b0] sm:$0xff]
        %v1755 = vld [vmem:[#allocation10 + $0x2b8] sm:$0xff]
        %v1756 = vld [vmem:[#allocation10 + $0x2c0] sm:$0xff]
        %v1757 = vld [vmem:[#allocation10 + $0x2c8] sm:$0xff]
        %v1758 = vld [vmem:[#allocation10 + $0x2d0] sm:$0xff]
        %v1759 = vld [vmem:[#allocation10 + $0x2d8] sm:$0xff]
        %v1760 = vld [vmem:[#allocation10 + $0x2e0] sm:$0xff]
        %v1761 = vld [vmem:[#allocation10 + $0x2e8] sm:$0xff]
        %v1762 = vld [vmem:[#allocation10 + $0x2f0] sm:$0xff]
        %v1763 = vld [vmem:[#allocation10 + $0x2f8] sm:$0xff]
        %v1764 = vld [vmem:[#allocation10 + $0x300] sm:$0xff]
        %v1765 = vld [vmem:[#allocation10 + $0x308] sm:$0xff]
        %v1766 = vld [vmem:[#allocation10 + $0x310] sm:$0xff]
        %v1767 = vld [vmem:[#allocation10 + $0x318] sm:$0xff]
        %v1768 = vld [vmem:[#allocation10 + $0x320] sm:$0xff]
        %v1769 = vld [vmem:[#allocation10 + $0x328] sm:$0xff]
        %v1770 = vld [vmem:[#allocation10 + $0x330] sm:$0xff]
        %v1771 = vld [vmem:[#allocation10 + $0x338] sm:$0xff]
        %v1772 = vld [vmem:[#allocation10 + $0x340] sm:$0xff]
        %v1773 = vld [vmem:[#allocation10 + $0x348] sm:$0xff]
        %v1774 = vld [vmem:[#allocation10 + $0x350] sm:$0xff]
        %v1775 = vld [vmem:[#allocation10 + $0x358] sm:$0xff]
        %v1776 = vld [vmem:[#allocation10 + $0x360] sm:$0xff]
        %v1777 = vld [vmem:[#allocation10 + $0x368] sm:$0xff]
        %v1778 = vld [vmem:[#allocation10 + $0x370] sm:$0xff]
        %v1779 = vld [vmem:[#allocation10 + $0x378] sm:$0xff]
        %v1780 = vld [vmem:[#allocation10 + $0x380] sm:$0xff]
        %v1781 = vld [vmem:[#allocation10 + $0x388] sm:$0xff]
        %v1782 = vld [vmem:[#allocation10 + $0x390] sm:$0xff]
        %v1783 = vld [vmem:[#allocation10 + $0x398] sm:$0xff]
        %v1784 = vld [vmem:[#allocation10 + $0x3a0] sm:$0xff]
        %v1785 = vld [vmem:[#allocation10 + $0x3a8] sm:$0xff]
        %v1786 = vld [vmem:[#allocation10 + $0x3b0] sm:$0xff]
        %v1787 = vld [vmem:[#allocation10 + $0x3b8] sm:$0xff]
        %v1788 = vld [vmem:[#allocation10 + $0x3c0] sm:$0xff]
        %v1789 = vld [vmem:[#allocation10 + $0x3c8] sm:$0xff]
        %v1790 = vld [vmem:[#allocation10 + $0x3d0] sm:$0xff]
        %v1791 = vld [vmem:[#allocation10 + $0x3d8] sm:$0xff]
        %v1792 = vld [vmem:[#allocation10 + $0x3e0] sm:$0xff]
        %v1793 = vld [vmem:[#allocation10 + $0x3e8] sm:$0xff]
        %v1794 = vld [vmem:[#allocation10 + $0x3f0] sm:$0xff]
        %v1795 = vld [vmem:[#allocation10 + $0x3f8] sm:$0xff]
        %v1924 = vunpack.c.l.b16 %v1668
        %v1925 = vunpack.c.h.b16 %v1668
        %v1926 = vunpack.c.l.b16 %v1669
        %v1927 = vunpack.c.h.b16 %v1669
        %v1928 = vunpack.c.l.b16 %v1670
        %v1929 = vunpack.c.h.b16 %v1670
        %v1930 = vunpack.c.l.b16 %v1671
        %v1931 = vunpack.c.h.b16 %v1671
        %v1932 = vunpack.c.l.b16 %v1672
        %v1933 = vunpack.c.h.b16 %v1672
        %v1934 = vunpack.c.l.b16 %v1673
        %v1935 = vunpack.c.h.b16 %v1673
        %v1936 = vunpack.c.l.b16 %v1674
        %v1937 = vunpack.c.h.b16 %v1674
        %v1938 = vunpack.c.l.b16 %v1675
        %v1939 = vunpack.c.h.b16 %v1675
        %v1940 = vunpack.c.l.b16 %v1676
        %v1941 = vunpack.c.h.b16 %v1676
        %v1942 = vunpack.c.l.b16 %v1677
        %v1943 = vunpack.c.h.b16 %v1677
        %v1944 = vunpack.c.l.b16 %v1678
        %v1945 = vunpack.c.h.b16 %v1678
        %v1946 = vunpack.c.l.b16 %v1679
        %v1947 = vunpack.c.h.b16 %v1679
        %v1948 = vunpack.c.l.b16 %v1680
        %v1949 = vunpack.c.h.b16 %v1680
        %v1950 = vunpack.c.l.b16 %v1681
        %v1951 = vunpack.c.h.b16 %v1681
        %v1952 = vunpack.c.l.b16 %v1682
        %v1953 = vunpack.c.h.b16 %v1682
        %v1954 = vunpack.c.l.b16 %v1683
        %v1955 = vunpack.c.h.b16 %v1683
        %v1956 = vunpack.c.l.b16 %v1684
        %v1957 = vunpack.c.h.b16 %v1684
        %v1958 = vunpack.c.l.b16 %v1685
        %v1959 = vunpack.c.h.b16 %v1685
        %v1960 = vunpack.c.l.b16 %v1686
        %v1961 = vunpack.c.h.b16 %v1686
        %v1962 = vunpack.c.l.b16 %v1687
        %v1963 = vunpack.c.h.b16 %v1687
        %v1964 = vunpack.c.l.b16 %v1688
        %v1965 = vunpack.c.h.b16 %v1688
        %v1966 = vunpack.c.l.b16 %v1689
        %v1967 = vunpack.c.h.b16 %v1689
        %v1968 = vunpack.c.l.b16 %v1690
        %v1969 = vunpack.c.h.b16 %v1690
        %v1970 = vunpack.c.l.b16 %v1691
        %v1971 = vunpack.c.h.b16 %v1691
        %v1972 = vunpack.c.l.b16 %v1692
        %v1973 = vunpack.c.h.b16 %v1692
        %v1974 = vunpack.c.l.b16 %v1693
        %v1975 = vunpack.c.h.b16 %v1693
        %v1976 = vunpack.c.l.b16 %v1694
        %v1977 = vunpack.c.h.b16 %v1694
        %v1978 = vunpack.c.l.b16 %v1695
        %v1979 = vunpack.c.h.b16 %v1695
        %v1980 = vunpack.c.l.b16 %v1696
        %v1981 = vunpack.c.h.b16 %v1696
        %v1982 = vunpack.c.l.b16 %v1697
        %v1983 = vunpack.c.h.b16 %v1697
        %v1984 = vunpack.c.l.b16 %v1698
        %v1985 = vunpack.c.h.b16 %v1698
        %v1986 = vunpack.c.l.b16 %v1699
        %v1987 = vunpack.c.h.b16 %v1699
        %v1988 = vunpack.c.l.b16 %v1700
        %v1989 = vunpack.c.h.b16 %v1700
        %v1990 = vunpack.c.l.b16 %v1701
        %v1991 = vunpack.c.h.b16 %v1701
        %v1992 = vunpack.c.l.b16 %v1702
        %v1993 = vunpack.c.h.b16 %v1702
        %v1994 = vunpack.c.l.b16 %v1703
        %v1995 = vunpack.c.h.b16 %v1703
        %v1996 = vunpack.c.l.b16 %v1704
        %v1997 = vunpack.c.h.b16 %v1704
        %v1998 = vunpack.c.l.b16 %v1705
        %v1999 = vunpack.c.h.b16 %v1705
        %v2000 = vunpack.c.l.b16 %v1706
        %v2001 = vunpack.c.h.b16 %v1706
        %v2002 = vunpack.c.l.b16 %v1707
        %v2003 = vunpack.c.h.b16 %v1707
        %v2004 = vunpack.c.l.b16 %v1708
        %v2005 = vunpack.c.h.b16 %v1708
        %v2006 = vunpack.c.l.b16 %v1709
        %v2007 = vunpack.c.h.b16 %v1709
        %v2008 = vunpack.c.l.b16 %v1710
        %v2009 = vunpack.c.h.b16 %v1710
        %v2010 = vunpack.c.l.b16 %v1711
        %v2011 = vunpack.c.h.b16 %v1711
        %v2012 = vunpack.c.l.b16 %v1712
        %v2013 = vunpack.c.h.b16 %v1712
        %v2014 = vunpack.c.l.b16 %v1713
        %v2015 = vunpack.c.h.b16 %v1713
        %v2016 = vunpack.c.l.b16 %v1714
        %v2017 = vunpack.c.h.b16 %v1714
        %v2018 = vunpack.c.l.b16 %v1715
        %v2019 = vunpack.c.h.b16 %v1715
        %v2020 = vunpack.c.l.b16 %v1716
        %v2021 = vunpack.c.h.b16 %v1716
        %v2022 = vunpack.c.l.b16 %v1717
        %v2023 = vunpack.c.h.b16 %v1717
        %v2024 = vunpack.c.l.b16 %v1718
        %v2025 = vunpack.c.h.b16 %v1718
        %v2026 = vunpack.c.l.b16 %v1719
        %v2027 = vunpack.c.h.b16 %v1719
        %v2028 = vunpack.c.l.b16 %v1720
        %v2029 = vunpack.c.h.b16 %v1720
        %v2030 = vunpack.c.l.b16 %v1721
        %v2031 = vunpack.c.h.b16 %v1721
        %v2032 = vunpack.c.l.b16 %v1722
        %v2033 = vunpack.c.h.b16 %v1722
        %v2034 = vunpack.c.l.b16 %v1723
        %v2035 = vunpack.c.h.b16 %v1723
        %v2036 = vunpack.c.l.b16 %v1724
        %v2037 = vunpack.c.h.b16 %v1724
        %v2038 = vunpack.c.l.b16 %v1725
        %v2039 = vunpack.c.h.b16 %v1725
        %v2040 = vunpack.c.l.b16 %v1726
        %v2041 = vunpack.c.h.b16 %v1726
        %v2042 = vunpack.c.l.b16 %v1727
        %v2043 = vunpack.c.h.b16 %v1727
        %v2044 = vunpack.c.l.b16 %v1728
        %v2045 = vunpack.c.h.b16 %v1728
        %v2046 = vunpack.c.l.b16 %v1729
        %v2047 = vunpack.c.h.b16 %v1729
        %v2048 = vunpack.c.l.b16 %v1730
        %v2049 = vunpack.c.h.b16 %v1730
        %v2050 = vunpack.c.l.b16 %v1731
        %v2051 = vunpack.c.h.b16 %v1731
        %v2052 = vunpack.c.l.b16 %v1732
        %v2053 = vunpack.c.h.b16 %v1732
        %v2054 = vunpack.c.l.b16 %v1733
        %v2055 = vunpack.c.h.b16 %v1733
        %v2056 = vunpack.c.l.b16 %v1734
        %v2057 = vunpack.c.h.b16 %v1734
        %v2058 = vunpack.c.l.b16 %v1735
        %v2059 = vunpack.c.h.b16 %v1735
        %v2060 = vunpack.c.l.b16 %v1736
        %v2061 = vunpack.c.h.b16 %v1736
        %v2062 = vunpack.c.l.b16 %v1737
        %v2063 = vunpack.c.h.b16 %v1737
        %v2064 = vunpack.c.l.b16 %v1738
        %v2065 = vunpack.c.h.b16 %v1738
        %v2066 = vunpack.c.l.b16 %v1739
        %v2067 = vunpack.c.h.b16 %v1739
        %v2068 = vunpack.c.l.b16 %v1740
        %v2069 = vunpack.c.h.b16 %v1740
        %v2070 = vunpack.c.l.b16 %v1741
        %v2071 = vunpack.c.h.b16 %v1741
        %v2072 = vunpack.c.l.b16 %v1742
        %v2073 = vunpack.c.h.b16 %v1742
        %v2074 = vunpack.c.l.b16 %v1743
        %v2075 = vunpack.c.h.b16 %v1743
        %v2076 = vunpack.c.l.b16 %v1744
        %v2077 = vunpack.c.h.b16 %v1744
        %v2078 = vunpack.c.l.b16 %v1745
        %v2079 = vunpack.c.h.b16 %v1745
        %v2080 = vunpack.c.l.b16 %v1746
        %v2081 = vunpack.c.h.b16 %v1746
        %v2082 = vunpack.c.l.b16 %v1747
        %v2083 = vunpack.c.h.b16 %v1747
        %v2084 = vunpack.c.l.b16 %v1748
        %v2085 = vunpack.c.h.b16 %v1748
        %v2086 = vunpack.c.l.b16 %v1749
        %v2087 = vunpack.c.h.b16 %v1749
        %v2088 = vunpack.c.l.b16 %v1750
        %v2089 = vunpack.c.h.b16 %v1750
        %v2090 = vunpack.c.l.b16 %v1751
        %v2091 = vunpack.c.h.b16 %v1751
        %v2092 = vunpack.c.l.b16 %v1752
        %v2093 = vunpack.c.h.b16 %v1752
        %v2094 = vunpack.c.l.b16 %v1753
        %v2095 = vunpack.c.h.b16 %v1753
        %v2096 = vunpack.c.l.b16 %v1754
        %v2097 = vunpack.c.h.b16 %v1754
        %v2098 = vunpack.c.l.b16 %v1755
        %v2099 = vunpack.c.h.b16 %v1755
        %v2100 = vunpack.c.l.b16 %v1756
        %v2101 = vunpack.c.h.b16 %v1756
        %v2102 = vunpack.c.l.b16 %v1757
        %v2103 = vunpack.c.h.b16 %v1757
        %v2104 = vunpack.c.l.b16 %v1758
        %v2105 = vunpack.c.h.b16 %v1758
        %v2106 = vunpack.c.l.b16 %v1759
        %v2107 = vunpack.c.h.b16 %v1759
        %v2108 = vunpack.c.l.b16 %v1760
        %v2109 = vunpack.c.h.b16 %v1760
        %v2110 = vunpack.c.l.b16 %v1761
        %v2111 = vunpack.c.h.b16 %v1761
        %v2112 = vunpack.c.l.b16 %v1762
        %v2113 = vunpack.c.h.b16 %v1762
        %v2114 = vunpack.c.l.b16 %v1763
        %v2115 = vunpack.c.h.b16 %v1763
        %v2116 = vunpack.c.l.b16 %v1764
        %v2117 = vunpack.c.h.b16 %v1764
        %v2118 = vunpack.c.l.b16 %v1765
        %v2119 = vunpack.c.h.b16 %v1765
        %v2120 = vunpack.c.l.b16 %v1766
        %v2121 = vunpack.c.h.b16 %v1766
        %v2122 = vunpack.c.l.b16 %v1767
        %v2123 = vunpack.c.h.b16 %v1767
        %v2124 = vunpack.c.l.b16 %v1768
        %v2125 = vunpack.c.h.b16 %v1768
        %v2126 = vunpack.c.l.b16 %v1769
        %v2127 = vunpack.c.h.b16 %v1769
        %v2128 = vunpack.c.l.b16 %v1770
        %v2129 = vunpack.c.h.b16 %v1770
        %v2130 = vunpack.c.l.b16 %v1771
        %v2131 = vunpack.c.h.b16 %v1771
        %v2132 = vunpack.c.l.b16 %v1772
        %v2133 = vunpack.c.h.b16 %v1772
        %v2134 = vunpack.c.l.b16 %v1773
        %v2135 = vunpack.c.h.b16 %v1773
        %v2136 = vunpack.c.l.b16 %v1774
        %v2137 = vunpack.c.h.b16 %v1774
        %v2138 = vunpack.c.l.b16 %v1775
        %v2139 = vunpack.c.h.b16 %v1775
        %v2140 = vunpack.c.l.b16 %v1776
        %v2141 = vunpack.c.h.b16 %v1776
        %v2142 = vunpack.c.l.b16 %v1777
        %v2143 = vunpack.c.h.b16 %v1777
        %v2144 = vunpack.c.l.b16 %v1778
        %v2145 = vunpack.c.h.b16 %v1778
        %v2146 = vunpack.c.l.b16 %v1779
        %v2147 = vunpack.c.h.b16 %v1779
        %v2148 = vunpack.c.l.b16 %v1780
        %v2149 = vunpack.c.h.b16 %v1780
        %v2150 = vunpack.c.l.b16 %v1781
        %v2151 = vunpack.c.h.b16 %v1781
        %v2152 = vunpack.c.l.b16 %v1782
        %v2153 = vunpack.c.h.b16 %v1782
        %v2154 = vunpack.c.l.b16 %v1783
        %v2155 = vunpack.c.h.b16 %v1783
        %v2156 = vunpack.c.l.b16 %v1784
        %v2157 = vunpack.c.h.b16 %v1784
        %v2158 = vunpack.c.l.b16 %v1785
        %v2159 = vunpack.c.h.b16 %v1785
        %v2160 = vunpack.c.l.b16 %v1786
        %v2161 = vunpack.c.h.b16 %v1786
        %v2162 = vunpack.c.l.b16 %v1787
        %v2163 = vunpack.c.h.b16 %v1787
        %v2164 = vunpack.c.l.b16 %v1788
        %v2165 = vunpack.c.h.b16 %v1788
        %v2166 = vunpack.c.l.b16 %v1789
        %v2167 = vunpack.c.h.b16 %v1789
        %v2168 = vunpack.c.l.b16 %v1790
        %v2169 = vunpack.c.h.b16 %v1790
        %v2170 = vunpack.c.l.b16 %v1791
        %v2171 = vunpack.c.h.b16 %v1791
        %v2172 = vunpack.c.l.b16 %v1792
        %v2173 = vunpack.c.h.b16 %v1792
        %v2174 = vunpack.c.l.b16 %v1793
        %v2175 = vunpack.c.h.b16 %v1793
        %v2176 = vunpack.c.l.b16 %v1794
        %v2177 = vunpack.c.h.b16 %v1794
        %v2178 = vunpack.c.l.b16 %v1795
        %v2179 = vunpack.c.h.b16 %v1795
        %v2180 = vpack.c.b16 %v1928, %v1924
        %v2181 = vpack.c.b16 %v1929, %v1925
        %v2182 = vpack.c.b16 %v1930, %v1926
        %v2183 = vpack.c.b16 %v1931, %v1927
        %v2184 = vpack.c.b16 %v1936, %v1932
        %v2185 = vpack.c.b16 %v1937, %v1933
        %v2186 = vpack.c.b16 %v1938, %v1934
        %v2187 = vpack.c.b16 %v1939, %v1935
        %v2188 = vpack.c.b16 %v1944, %v1940
        %v2189 = vpack.c.b16 %v1945, %v1941
        %v2190 = vpack.c.b16 %v1946, %v1942
        %v2191 = vpack.c.b16 %v1947, %v1943
        %v2192 = vpack.c.b16 %v1952, %v1948
        %v2193 = vpack.c.b16 %v1953, %v1949
        %v2194 = vpack.c.b16 %v1954, %v1950
        %v2195 = vpack.c.b16 %v1955, %v1951
        %v2196 = vpack.c.b16 %v1960, %v1956
        %v2197 = vpack.c.b16 %v1961, %v1957
        %v2198 = vpack.c.b16 %v1962, %v1958
        %v2199 = vpack.c.b16 %v1963, %v1959
        %v2200 = vpack.c.b16 %v1968, %v1964
        %v2201 = vpack.c.b16 %v1969, %v1965
        %v2202 = vpack.c.b16 %v1970, %v1966
        %v2203 = vpack.c.b16 %v1971, %v1967
        %v2204 = vpack.c.b16 %v1976, %v1972
        %v2205 = vpack.c.b16 %v1977, %v1973
        %v2206 = vpack.c.b16 %v1978, %v1974
        %v2207 = vpack.c.b16 %v1979, %v1975
        %v2208 = vpack.c.b16 %v1984, %v1980
        %v2209 = vpack.c.b16 %v1985, %v1981
        %v2210 = vpack.c.b16 %v1986, %v1982
        %v2211 = vpack.c.b16 %v1987, %v1983
        %v2212 = vpack.c.b16 %v1992, %v1988
        %v2213 = vpack.c.b16 %v1993, %v1989
        %v2214 = vpack.c.b16 %v1994, %v1990
        %v2215 = vpack.c.b16 %v1995, %v1991
        %v2216 = vpack.c.b16 %v2000, %v1996
        %v2217 = vpack.c.b16 %v2001, %v1997
        %v2218 = vpack.c.b16 %v2002, %v1998
        %v2219 = vpack.c.b16 %v2003, %v1999
        %v2220 = vpack.c.b16 %v2008, %v2004
        %v2221 = vpack.c.b16 %v2009, %v2005
        %v2222 = vpack.c.b16 %v2010, %v2006
        %v2223 = vpack.c.b16 %v2011, %v2007
        %v2224 = vpack.c.b16 %v2016, %v2012
        %v2225 = vpack.c.b16 %v2017, %v2013
        %v2226 = vpack.c.b16 %v2018, %v2014
        %v2227 = vpack.c.b16 %v2019, %v2015
        %v2228 = vpack.c.b16 %v2024, %v2020
        %v2229 = vpack.c.b16 %v2025, %v2021
        %v2230 = vpack.c.b16 %v2026, %v2022
        %v2231 = vpack.c.b16 %v2027, %v2023
        %v2232 = vpack.c.b16 %v2032, %v2028
        %v2233 = vpack.c.b16 %v2033, %v2029
        %v2234 = vpack.c.b16 %v2034, %v2030
        %v2235 = vpack.c.b16 %v2035, %v2031
        %v2236 = vpack.c.b16 %v2040, %v2036
        %v2237 = vpack.c.b16 %v2041, %v2037
        %v2238 = vpack.c.b16 %v2042, %v2038
        %v2239 = vpack.c.b16 %v2043, %v2039
        %v2240 = vpack.c.b16 %v2048, %v2044
        %v2241 = vpack.c.b16 %v2049, %v2045
        %v2242 = vpack.c.b16 %v2050, %v2046
        %v2243 = vpack.c.b16 %v2051, %v2047
        %v2244 = vpack.c.b16 %v2056, %v2052
        %v2245 = vpack.c.b16 %v2057, %v2053
        %v2246 = vpack.c.b16 %v2058, %v2054
        %v2247 = vpack.c.b16 %v2059, %v2055
        %v2248 = vpack.c.b16 %v2064, %v2060
        %v2249 = vpack.c.b16 %v2065, %v2061
        %v2250 = vpack.c.b16 %v2066, %v2062
        %v2251 = vpack.c.b16 %v2067, %v2063
        %v2252 = vpack.c.b16 %v2072, %v2068
        %v2253 = vpack.c.b16 %v2073, %v2069
        %v2254 = vpack.c.b16 %v2074, %v2070
        %v2255 = vpack.c.b16 %v2075, %v2071
        %v2256 = vpack.c.b16 %v2080, %v2076
        %v2257 = vpack.c.b16 %v2081, %v2077
        %v2258 = vpack.c.b16 %v2082, %v2078
        %v2259 = vpack.c.b16 %v2083, %v2079
        %v2260 = vpack.c.b16 %v2088, %v2084
        %v2261 = vpack.c.b16 %v2089, %v2085
        %v2262 = vpack.c.b16 %v2090, %v2086
        %v2263 = vpack.c.b16 %v2091, %v2087
        %v2264 = vpack.c.b16 %v2096, %v2092
        %v2265 = vpack.c.b16 %v2097, %v2093
        %v2266 = vpack.c.b16 %v2098, %v2094
        %v2267 = vpack.c.b16 %v2099, %v2095
        %v2268 = vpack.c.b16 %v2104, %v2100
        %v2269 = vpack.c.b16 %v2105, %v2101
        %v2270 = vpack.c.b16 %v2106, %v2102
        %v2271 = vpack.c.b16 %v2107, %v2103
        %v2272 = vpack.c.b16 %v2112, %v2108
        %v2273 = vpack.c.b16 %v2113, %v2109
        %v2274 = vpack.c.b16 %v2114, %v2110
        %v2275 = vpack.c.b16 %v2115, %v2111
        %v2276 = vpack.c.b16 %v2120, %v2116
        %v2277 = vpack.c.b16 %v2121, %v2117
        %v2278 = vpack.c.b16 %v2122, %v2118
        %v2279 = vpack.c.b16 %v2123, %v2119
        %v2280 = vpack.c.b16 %v2128, %v2124
        %v2281 = vpack.c.b16 %v2129, %v2125
        %v2282 = vpack.c.b16 %v2130, %v2126
        %v2283 = vpack.c.b16 %v2131, %v2127
        %v2284 = vpack.c.b16 %v2136, %v2132
        %v2285 = vpack.c.b16 %v2137, %v2133
        %v2286 = vpack.c.b16 %v2138, %v2134
        %v2287 = vpack.c.b16 %v2139, %v2135
        %v2288 = vpack.c.b16 %v2144, %v2140
        %v2289 = vpack.c.b16 %v2145, %v2141
        %v2290 = vpack.c.b16 %v2146, %v2142
        %v2291 = vpack.c.b16 %v2147, %v2143
        %v2292 = vpack.c.b16 %v2152, %v2148
        %v2293 = vpack.c.b16 %v2153, %v2149
        %v2294 = vpack.c.b16 %v2154, %v2150
        %v2295 = vpack.c.b16 %v2155, %v2151
        %v2296 = vpack.c.b16 %v2160, %v2156
        %v2297 = vpack.c.b16 %v2161, %v2157
        %v2298 = vpack.c.b16 %v2162, %v2158
        %v2299 = vpack.c.b16 %v2163, %v2159
        %v2300 = vpack.c.b16 %v2168, %v2164
        %v2301 = vpack.c.b16 %v2169, %v2165
        %v2302 = vpack.c.b16 %v2170, %v2166
        %v2303 = vpack.c.b16 %v2171, %v2167
        %v2304 = vpack.c.b16 %v2176, %v2172
        %v2305 = vpack.c.b16 %v2177, %v2173
        %v2306 = vpack.c.b16 %v2178, %v2174
        %v2307 = vpack.c.b16 %v2179, %v2175
        %2436 = vmatprep.subr.bf16.mxu0 %v2181
        %2437 = vmatpush1.bf16.msra.mxu0 %v2180
        %2438 = vmatprep.subr.bf16.mxu0 %v2185
        %2439 = vmatpush1.bf16.msra.mxu0 %v2184
        %2440 = vmatprep.subr.bf16.mxu0 %v2189
        %2441 = vmatpush1.bf16.msra.mxu0 %v2188
        %2442 = vmatprep.subr.bf16.mxu0 %v2193
        %2443 = vmatpush1.bf16.msra.mxu0 %v2192
        %2444 = vmatprep.subr.bf16.mxu0 %v2197
        %2445 = vmatpush1.bf16.msra.mxu0 %v2196
        %2446 = vmatprep.subr.bf16.mxu0 %v2201
        %2447 = vmatpush1.bf16.msra.mxu0 %v2200
        %2448 = vmatprep.subr.bf16.mxu0 %v2205
        %2449 = vmatpush1.bf16.msra.mxu0 %v2204
        %2450 = vmatprep.subr.bf16.mxu0 %v2209
        %2451 = vmatpush1.bf16.msra.mxu0 %v2208
        %2452 = vmatprep.subr.bf16.mxu0 %v2213
        %2453 = vmatpush1.bf16.msra.mxu0 %v2212
        %2454 = vmatprep.subr.bf16.mxu0 %v2217
        %2455 = vmatpush1.bf16.msra.mxu0 %v2216
        %2456 = vmatprep.subr.bf16.mxu0 %v2221
        %2457 = vmatpush1.bf16.msra.mxu0 %v2220
        %2458 = vmatprep.subr.bf16.mxu0 %v2225
        %2459 = vmatpush1.bf16.msra.mxu0 %v2224
        %2460 = vmatprep.subr.bf16.mxu0 %v2229
        %2461 = vmatpush1.bf16.msra.mxu0 %v2228
        %2462 = vmatprep.subr.bf16.mxu0 %v2233
        %2463 = vmatpush1.bf16.msra.mxu0 %v2232
        %2464 = vmatprep.subr.bf16.mxu0 %v2237
        %2465 = vmatpush1.bf16.msra.mxu0 %v2236
        %2466 = vmatprep.subr.bf16.mxu0 %v2241
        %2467 = vmatpush1.bf16.msra.mxu0 %v2240
        %2468 = vmatprep.mubr.bf16.mxu0 %v475
        %2469 = vmatmul.mubr.bf16.gmra.mrb[0].mxu0 %v474
        %v2470 = vpop.f32.mrb[0].mxu0
        %v2471 = vadd.f32 0.0, %v2470
        %v2472 = vpop.f32.mrb[0].mxu0
        %v2473 = vadd.f32 0.0, %v2472
        %v2474 = vpop.f32.mrb[0].mxu0
        %v2475 = vadd.f32 0.0, %v2474
        %v2476 = vpop.f32.mrb[0].mxu0
        %v2477 = vadd.f32 0.0, %v2476
        %2478 = vdwg.mxu0
        %2479 = vmatprep.subr.bf16.mxu0 %v2245
        %2480 = vmatpush1.bf16.msra.mxu0 %v2244
        %2481 = vmatprep.subr.bf16.mxu0 %v2249
        %2482 = vmatpush1.bf16.msra.mxu0 %v2248
        %2483 = vmatprep.subr.bf16.mxu0 %v2253
        %2484 = vmatpush1.bf16.msra.mxu0 %v2252
        %2485 = vmatprep.subr.bf16.mxu0 %v2257
        %2486 = vmatpush1.bf16.msra.mxu0 %v2256
        %2487 = vmatprep.subr.bf16.mxu0 %v2261
        %2488 = vmatpush1.bf16.msra.mxu0 %v2260
        %2489 = vmatprep.subr.bf16.mxu0 %v2265
        %2490 = vmatpush1.bf16.msra.mxu0 %v2264
        %2491 = vmatprep.subr.bf16.mxu0 %v2269
        %2492 = vmatpush1.bf16.msra.mxu0 %v2268
        %2493 = vmatprep.subr.bf16.mxu0 %v2273
        %2494 = vmatpush1.bf16.msra.mxu0 %v2272
        %2495 = vmatprep.subr.bf16.mxu0 %v2277
        %2496 = vmatpush1.bf16.msra.mxu0 %v2276
        %2497 = vmatprep.subr.bf16.mxu0 %v2281
        %2498 = vmatpush1.bf16.msra.mxu0 %v2280
        %2499 = vmatprep.subr.bf16.mxu0 %v2285
        %2500 = vmatpush1.bf16.msra.mxu0 %v2284
        %2501 = vmatprep.subr.bf16.mxu0 %v2289
        %2502 = vmatpush1.bf16.msra.mxu0 %v2288
        %2503 = vmatprep.subr.bf16.mxu0 %v2293
        %2504 = vmatpush1.bf16.msra.mxu0 %v2292
        %2505 = vmatprep.subr.bf16.mxu0 %v2297
        %2506 = vmatpush1.bf16.msra.mxu0 %v2296
        %2507 = vmatprep.subr.bf16.mxu0 %v2301
        %2508 = vmatpush1.bf16.msra.mxu0 %v2300
        %2509 = vmatprep.subr.bf16.mxu0 %v2305
        %2510 = vmatpush1.bf16.msra.mxu0 %v2304
        %2511 = vmatprep.mubr.bf16.mxu0 %v477
        %2512 = vmatmul.mubr.bf16.gmra.mrb[0].mxu0 %v476
        %v2513 = vpop.f32.mrb[0].mxu0
        %v2514 = vadd.f32 %v2471, %v2513
        %v2515 = vpop.f32.mrb[0].mxu0
        %v2516 = vadd.f32 %v2473, %v2515
        %v2517 = vpop.f32.mrb[0].mxu0
        %v2518 = vadd.f32 %v2475, %v2517
        %v2519 = vpop.f32.mrb[0].mxu0
        %v2520 = vadd.f32 %v2477, %v2519
        %2521 = vdwg.mxu0
        %2522 = vmatprep.subr.bf16.mxu0 %v2183
        %2523 = vmatpush1.bf16.msra.mxu0 %v2182
        %2524 = vmatprep.subr.bf16.mxu0 %v2187
        %2525 = vmatpush1.bf16.msra.mxu0 %v2186
        %2526 = vmatprep.subr.bf16.mxu0 %v2191
        %2527 = vmatpush1.bf16.msra.mxu0 %v2190
        %2528 = vmatprep.subr.bf16.mxu0 %v2195
        %2529 = vmatpush1.bf16.msra.mxu0 %v2194
        %2530 = vmatprep.subr.bf16.mxu0 %v2199
        %2531 = vmatpush1.bf16.msra.mxu0 %v2198
        %2532 = vmatprep.subr.bf16.mxu0 %v2203
        %2533 = vmatpush1.bf16.msra.mxu0 %v2202
        %2534 = vmatprep.subr.bf16.mxu0 %v2207
        %2535 = vmatpush1.bf16.msra.mxu0 %v2206
        %2536 = vmatprep.subr.bf16.mxu0 %v2211
        %2537 = vmatpush1.bf16.msra.mxu0 %v2210
        %2538 = vmatprep.subr.bf16.mxu0 %v2215
        %2539 = vmatpush1.bf16.msra.mxu0 %v2214
        %2540 = vmatprep.subr.bf16.mxu0 %v2219
        %2541 = vmatpush1.bf16.msra.mxu0 %v2218
        %2542 = vmatprep.subr.bf16.mxu0 %v2223
        %2543 = vmatpush1.bf16.msra.mxu0 %v2222
        %2544 = vmatprep.subr.bf16.mxu0 %v2227
        %2545 = vmatpush1.bf16.msra.mxu0 %v2226
        %2546 = vmatprep.subr.bf16.mxu0 %v2231
        %2547 = vmatpush1.bf16.msra.mxu0 %v2230
        %2548 = vmatprep.subr.bf16.mxu0 %v2235
        %2549 = vmatpush1.bf16.msra.mxu0 %v2234
        %2550 = vmatprep.subr.bf16.mxu0 %v2239
        %2551 = vmatpush1.bf16.msra.mxu0 %v2238
        %2552 = vmatprep.subr.bf16.mxu0 %v2243
        %2553 = vmatpush1.bf16.msra.mxu0 %v2242
        %2554 = vmatprep.mubr.bf16.mxu0 %v475
        %2555 = vmatmul.mubr.bf16.gmra.mrb[0].mxu0 %v474
        %v2556 = vpop.f32.mrb[0].mxu0
        %v2557 = vadd.f32 0.0, %v2556
        %v2558 = vpop.f32.mrb[0].mxu0
        %v2559 = vadd.f32 0.0, %v2558
        %v2560 = vpop.f32.mrb[0].mxu0
        %v2561 = vadd.f32 0.0, %v2560
        %v2562 = vpop.f32.mrb[0].mxu0
        %v2563 = vadd.f32 0.0, %v2562
        %2564 = vdwg.mxu0
        %2565 = vmatprep.subr.bf16.mxu0 %v2247
        %2566 = vmatpush1.bf16.msra.mxu0 %v2246
        %2567 = vmatprep.subr.bf16.mxu0 %v2251
        %2568 = vmatpush1.bf16.msra.mxu0 %v2250
        %2569 = vmatprep.subr.bf16.mxu0 %v2255
        %2570 = vmatpush1.bf16.msra.mxu0 %v2254
        %2571 = vmatprep.subr.bf16.mxu0 %v2259
        %2572 = vmatpush1.bf16.msra.mxu0 %v2258
        %2573 = vmatprep.subr.bf16.mxu0 %v2263
        %2574 = vmatpush1.bf16.msra.mxu0 %v2262
        %2575 = vmatprep.subr.bf16.mxu0 %v2267
        %2576 = vmatpush1.bf16.msra.mxu0 %v2266
        %2577 = vmatprep.subr.bf16.mxu0 %v2271
        %2578 = vmatpush1.bf16.msra.mxu0 %v2270
        %2579 = vmatprep.subr.bf16.mxu0 %v2275
        %2580 = vmatpush1.bf16.msra.mxu0 %v2274
        %2581 = vmatprep.subr.bf16.mxu0 %v2279
        %2582 = vmatpush1.bf16.msra.mxu0 %v2278
        %2583 = vmatprep.subr.bf16.mxu0 %v2283
        %2584 = vmatpush1.bf16.msra.mxu0 %v2282
        %2585 = vmatprep.subr.bf16.mxu0 %v2287
        %2586 = vmatpush1.bf16.msra.mxu0 %v2286
        %2587 = vmatprep.subr.bf16.mxu0 %v2291
        %2588 = vmatpush1.bf16.msra.mxu0 %v2290
        %2589 = vmatprep.subr.bf16.mxu0 %v2295
        %2590 = vmatpush1.bf16.msra.mxu0 %v2294
        %2591 = vmatprep.subr.bf16.mxu0 %v2299
        %2592 = vmatpush1.bf16.msra.mxu0 %v2298
        %2593 = vmatprep.subr.bf16.mxu0 %v2303
        %2594 = vmatpush1.bf16.msra.mxu0 %v2302
        %2595 = vmatprep.subr.bf16.mxu0 %v2307
        %2596 = vmatpush1.bf16.msra.mxu0 %v2306
        %2597 = vmatprep.mubr.bf16.mxu0 %v477
        %2598 = vmatmul.mubr.bf16.gmra.mrb[0].mxu0 %v476
        %v2599 = vpop.f32.mrb[0].mxu0
        %v2600 = vadd.f32 %v2557, %v2599
        %v2601 = vpop.f32.mrb[0].mxu0
        %v2602 = vadd.f32 %v2559, %v2601
        %v2603 = vpop.f32.mrb[0].mxu0
        %v2604 = vadd.f32 %v2561, %v2603
        %v2605 = vpop.f32.mrb[0].mxu0
        %v2606 = vadd.f32 %v2563, %v2605
        %2607 = vdwg.mxu0
        %v2608 = vadd.f32 %v1660, %v2514
        %v2609 = vadd.f32 %v1661, %v2516
        %v2610 = vadd.f32 %v1662, %v2600
        %v2611 = vadd.f32 %v1663, %v2602
        %v2612 = vadd.f32 %v1664, %v2518
        %v2613 = vadd.f32 %v1665, %v2520
        %v2614 = vadd.f32 %v1666, %v2604
        %v2615 = vadd.f32 %v1667, %v2606
        %v2616 = vpack.c.bf16 %v2612, %v2608
        %v2617 = vpack.c.bf16 %v2613, %v2609
        %v2618 = vpack.c.bf16 %v2614, %v2610
        %v2619 = vpack.c.bf16 %v2615, %v2611
        %v2624 = vunpack.c.l.b16 %v2616
        %v2625 = vunpack.c.l.b16 %v2617
        %v2626 = vunpack.c.l.b16 %v2618
        %v2627 = vunpack.c.l.b16 %v2619
        %v2628 = vunpack.c.h.b16 %v2616
        %v2629 = vunpack.c.h.b16 %v2617
        %v2630 = vunpack.c.h.b16 %v2618
        %v2631 = vunpack.c.h.b16 %v2619
        %v2632 = vpack.c.b16 %v2625, %v2624
        %v2633 = vpack.c.b16 %v2627, %v2626
        %v2634 = vpack.c.b16 %v2629, %v2628
        %v2635 = vpack.c.b16 %v2631, %v2630
        %2640 = vst [vmem:[%s381] sm:$0xff] %v2632
        %2641 = vst [vmem:[%s381 + $0x8] sm:$0xff] %v2633
        %2642 = vst [vmem:[%s381 + $0x10] sm:$0xff] %v2634
        %2643 = vst [vmem:[%s381 + $0x18] sm:$0xff] %v2635
        %s2644 = sand.u32 %s208, 1
        %s2645 = scalar_lea.sflag [#allocation4], %s2644
        %s2646 = sand.u32 %s208, 1
        %s2647 = smul.addr %s2646, 32
        %s2648 = scalar_lea.vmem [#allocation11], %s2647
        // Predicated region
        $region73: #{tpu_custom_call.1} parent=51 // pred_check
          %p2649 = pneg %p218
        $region74: #{tpu_custom_call.1} parent=51 // pred_check_branch
          %2651 = sbr.rel (%p2649) target = $region76
        $region75: #{tpu_custom_call.1} parent=51 // pred_region
          %s2653 = ssub.s32 512, 512
          %2654 = vsyncadd %s2645, %s2653
          %s2655 = smul.addr %s27, 8
          %s2656 = smul.addr %s2655, 64
          %s2657 = scalar_lea.hbm %s8, %s2656
          %s2658 = sshll.u32 %s2648, 4
          %s2659 = int_to_ptr.vmem [resolvable:$true] %s2658
          %2664 = dma.vmem_to_hbm [thread:$0]  %s2659, 512, %s2657, %s2645, 256, 256, 16
        $region76: #{tpu_custom_call.1} parent=51 // pred_fallthru
          _
      $region52: #{tpu_custom_call.1} parent=5 // pred_fallthru
        _
      %p2665 = scmp.le.s32.totalorder 2, %s22
      // Predicated region
      $region77: #{tpu_custom_call.1} parent=5 // pred_check
        %p2666 = pneg %p2665
      $region78: #{tpu_custom_call.1} parent=5 // pred_check_branch
        %2668 = sbr.rel (%p2666) target = $region80
      $region79: #{tpu_custom_call.1} parent=5 // pred_region
        %s2669 = ssub.s32 %s22, 2
        // Predicated region
        $region81: #{tpu_custom_call.1} parent=79 // pred_check
          %p2670 = pneg %p224
        $region82: #{tpu_custom_call.1} parent=79 // pred_check_branch
          %2672 = sbr.rel (%p2670) target = $region84
        $region83: #{tpu_custom_call.1} parent=79 // pred_region
          %s2673 = sand.u32 %s209, 1
          %s2674 = scalar_lea.sflag [#allocation4], %s2673
          %s2675 = sand.u32 %s209, 1
          %s2676 = smul.addr %s2675, 32
          %s2677 = scalar_lea.vmem [#allocation11], %s2676
          %2678 = dma.done %s2674, 512
        $region84: #{tpu_custom_call.1} parent=79 // pred_fallthru
          _
      $region80: #{tpu_custom_call.1} parent=5 // pred_fallthru
        _
    $region6: #{tpu_custom_call.1} parent=1 // loop_footer
      %s26 = sadd.s32 1, %s22
    $region7: #{tpu_custom_call.1} parent=1 // loop_footer_branch
      %21 = sbr.rel target = $region3
    $region8: #{tpu_custom_call.1} parent=1 // loop_exit
      _
    %2679 = vsyncpa [#allocation3], 1
    %s2680 = scalar_lea.sflag [#allocation3], 1
    %2681 = vsyncpa %s2680, 1
    %2682 = vsyncpa [#allocation6], 1
    %2683 = vsyncpa [#allocation9], 1
    %2684 = vsyncpa [#allocation4], 1
    %s2685 = scalar_lea.sflag [#allocation4], 1
    %2686 = vsyncpa %s2685, 1

</llo_original>
